<compile_context>
chip_gen: v6e
topology: v6e:2x2x1
jax: 0.10.0
libtpu: 0.0.40
codegen_flags: <defaults>
</compile_context>

<pallas_src>
import numpy as np

import jax
import jax.numpy as jnp
from jax.experimental import pallas as pl
from jax.experimental.pallas import tpu as pltpu


# ----------------------------------------------------------------------------
# In-kernel helpers (trace-time Python; all static slices / concats)
# ----------------------------------------------------------------------------
def _pool_relu(y, h_out, w_out, c):
    """2x2 max-pool + ReLU on one image's conv output.

    y: (2*h_out, 2*w_out*c) with lanes packed (width, channel).
    Returns (h_out, w_out*c).
    """
    rows = [jnp.maximum(y[2 * i:2 * i + 1, :], y[2 * i + 1:2 * i + 2, :])
            for i in range(h_out)]
    ph = jnp.concatenate(rows, axis=0)                       # (h_out, 2*w_out*c)
    cols = [jnp.maximum(ph[:, (2 * j) * c:(2 * j) * c + c],
                        ph[:, (2 * j + 1) * c:(2 * j + 1) * c + c])
            for j in range(w_out)]
    return jnp.maximum(jnp.concatenate(cols, axis=1), 0.0)   # (h_out, w_out*c)


# ----------------------------------------------------------------------------
# Fused Pallas kernel (one batch block of BB images per grid step)
# ----------------------------------------------------------------------------
def _fused_net_kernel(x_ref, t1_ref, b1_ref, t2_ref, b2_ref,
                      wf1_ref, bf1_ref, wf2_ref, bf2_ref, o_ref):
    """Whole Net forward for a block of BB images.

    x_ref  : (BB, 28, 28)  f32  input images (C_in == 1, channel squeezed)
    t1_ref : (140, 240)    bf16 conv1 band, rows = (ki, h_in), lanes = (w_out, c_out)
    b1_ref : (1, 240)      f32
    t2_ref : (600, 160)    bf16 conv2 band
    b2_ref : (1, 160)      f32
    wf1_ref: (320, 50)     bf16 fc1 weight (input dim pre-permuted to kernel order)
    bf1_ref: (1, 50)       f32
    wf2_ref: (50, 10)      bf16
    bf2_ref: (1, 10)       f32
    o_ref  : (BB, 10)      f32  log-probabilities
    """
    bb = x_ref.shape[0]

    # ---- conv1: one banded matmul for the whole block ----------------------
    # y1[(b,i), j*10 + c] = sum_{di,dj} x[b, i+di, j+dj] * w1[c, 0, di, dj]
    lhs1 = []
    for b in range(bb):
        xb = x_ref[b]                                                # (28, 28)
        lhs1.append(jnp.concatenate([xb[di:di + 24, :] for di in range(5)],
                                    axis=1))                         # (24, 140)
    lhs1 = jnp.concatenate(lhs1, axis=0).astype(jnp.bfloat16)        # (bb*24, 140)
    y1 = jnp.dot(lhs1, t1_ref[...],
                 preferred_element_type=jnp.float32) + b1_ref[...]   # (bb*24, 240)

    # ---- 2x2 max-pool + relu, then build conv2's banded LHS ----------------
    # TODO(synk): nn.Dropout2d is identity at inference; not applied.
    lhs2 = []
    for b in range(bb):
        p1b = _pool_relu(y1[b * 24:(b + 1) * 24, :], 12, 12, 10)     # (12, 120)
        lhs2.append(jnp.concatenate([p1b[di:di + 8, :] for di in range(5)],
                                    axis=1))                         # (8, 600)
    lhs2 = jnp.concatenate(lhs2, axis=0).astype(jnp.bfloat16)        # (bb*8, 600)

    # ---- conv2: one banded matmul for the whole block ----------------------
    y2 = jnp.dot(lhs2, t2_ref[...],
                 preferred_element_type=jnp.float32) + b2_ref[...]   # (bb*8, 160)

    # ---- 2x2 max-pool + relu + flatten (lane order h*80 + w*20 + c) --------
    flats = []
    for b in range(bb):
        p2b = _pool_relu(y2[b * 8:(b + 1) * 8, :], 4, 4, 20)         # (4, 80)
        flats.append(jnp.concatenate([p2b[i:i + 1, :] for i in range(4)],
                                     axis=1))                        # (1, 320)
    flat = jnp.concatenate(flats, axis=0).astype(jnp.bfloat16)       # (bb, 320)

    # ---- fc1 + relu (batched over the block) --------------------------------
    h = jnp.dot(flat, wf1_ref[...],
                preferred_element_type=jnp.float32) + bf1_ref[...]   # (bb, 50)
    h = jnp.maximum(h, 0.0)
    # TODO(synk): F.dropout is identity at inference (training=False); not applied.

    # ---- fc2 + log_softmax (batched) ----------------------------------------
    logits = jnp.dot(h.astype(jnp.bfloat16), wf2_ref[...],
                     preferred_element_type=jnp.float32) + bf2_ref[...]  # (bb, 10)
    m = jnp.max(logits, axis=-1, keepdims=True)
    z = logits - m
    lse = jnp.log(jnp.sum(jnp.exp(z), axis=-1, keepdims=True))
    o_ref[...] = (z - lse).astype(o_ref.dtype)


# ----------------------------------------------------------------------------
# Parameters (PyTorch layout) + one-time kernel-layout preparation
# ----------------------------------------------------------------------------
def init_params(key):
    """Deterministic synthetic parameters with PyTorch shapes."""
    ks = jax.random.split(key, 8)

    def u(k, shape, fan_in):
        bound = 1.0 / float(np.sqrt(fan_in))
        return jax.random.uniform(k, shape, jnp.float32, -bound, bound)

    return {
        "conv1_w": u(ks[0], (10, 1, 5, 5), 1 * 5 * 5),
        "conv1_b": u(ks[1], (10,), 1 * 5 * 5),
        "conv2_w": u(ks[2], (20, 10, 5, 5), 10 * 5 * 5),
        "conv2_b": u(ks[3], (20,), 10 * 5 * 5),
        "fc1_w": u(ks[4], (50, 320), 320),
        "fc1_b": u(ks[5], (50,), 320),
        "fc2_w": u(ks[6], (10, 50), 50),
        "fc2_b": u(ks[7], (10,), 50),
    }


def prepare_params(params):
    """One-time conversion of PyTorch-layout weights into kernel layouts.

    Conv weights become banded matrices T so a valid 5x5 conv is a single
    matmul over lanes packed (kernel_row, input_row/width/channel); fc1's
    input dim is permuted from torch's (c, h, w) flatten order to the kernel's
    (h, w, c) order so no activation shuffle happens at run time.
    """
    w1 = np.asarray(params["conv1_w"], np.float32)     # (10, 1, 5, 5)
    b1 = np.asarray(params["conv1_b"], np.float32)
    w2 = np.asarray(params["conv2_w"], np.float32)     # (20, 10, 5, 5)
    b2 = np.asarray(params["conv2_b"], np.float32)
    wf1 = np.asarray(params["fc1_w"], np.float32)      # (50, 320)
    bf1 = np.asarray(params["fc1_b"], np.float32)
    wf2 = np.asarray(params["fc2_w"], np.float32)      # (10, 50)
    bf2 = np.asarray(params["fc2_b"], np.float32)

    # conv1 band: t1[di, j+dj, j*10 + c] = w1[c, 0, di, dj]; fold di into rows.
    t1 = np.zeros((5, 28, 24 * 10), np.float32)
    for di in range(5):
        for j in range(24):
            for dj in range(5):
                t1[di, j + dj, j * 10:(j + 1) * 10] = w1[:, 0, di, dj]
    t1 = t1.reshape(5 * 28, 240)

    # conv2 band: t2[di, (j+dj)*10 + c, j*20 + d] = w2[d, c, di, dj]
    t2 = np.zeros((5, 12 * 10, 8 * 20), np.float32)
    for di in range(5):
        for j in range(8):
            for dj in range(5):
                a = j + dj
                t2[di, a * 10:(a + 1) * 10, j * 20:(j + 1) * 20] = \
                    w2[:, :, di, dj].T                          # (c_in, c_out)
    t2 = t2.reshape(5 * 120, 160)

    # fc1: kernel flatten order is (h, w, c); torch's view(-1, 320) is (c, h, w)
    wf1p = wf1.reshape(50, 20, 4, 4).transpose(0, 2, 3, 1).reshape(50, 320).T

    return {
        "t1": jnp.asarray(t1, jnp.bfloat16),                       # (140, 240)
        "b1": jnp.asarray(np.tile(b1, 24)[None, :], jnp.float32),  # (1, 240)
        "t2": jnp.asarray(t2, jnp.bfloat16),                       # (600, 160)
        "b2": jnp.asarray(np.tile(b2, 8)[None, :], jnp.float32),   # (1, 160)
        "wf1": jnp.asarray(wf1p, jnp.bfloat16),                    # (320, 50)
        "bf1": jnp.asarray(bf1[None, :], jnp.float32),             # (1, 50)
        "wf2": jnp.asarray(wf2.T, jnp.bfloat16),                   # (50, 10)
        "bf2": jnp.asarray(bf2[None, :], jnp.float32),             # (1, 10)
    }


# ----------------------------------------------------------------------------
# Forward (single fused pallas_call, grid over batch blocks)
# ----------------------------------------------------------------------------
def net_forward(x_nchw, prepared, block_b=8):
    """x_nchw: (N, 1, 28, 28) float32 -> (N, 10) log-probabilities."""
    n = x_nchw.shape[0]
    bb = min(block_b, n)
    n_pad = ((n + bb - 1) // bb) * bb
    x = x_nchw.reshape(n, 28, 28).astype(jnp.float32)   # C_in == 1: drop channel
    if n_pad != n:
        x = jnp.pad(x, ((0, n_pad - n), (0, 0), (0, 0)))

    out = pl.pallas_call(
        _fused_net_kernel,
        out_shape=jax.ShapeDtypeStruct((n_pad, 10), jnp.float32),
        grid=(n_pad // bb,),
        in_specs=[
            pl.BlockSpec((bb, 28, 28), lambda i: (i, 0, 0)),   # image block i
            pl.BlockSpec((140, 240), lambda i: (0, 0)),        # conv1 band (resident)
            pl.BlockSpec((1, 240), lambda i: (0, 0)),
            pl.BlockSpec((600, 160), lambda i: (0, 0)),        # conv2 band (resident)
            pl.BlockSpec((1, 160), lambda i: (0, 0)),
            pl.BlockSpec((320, 50), lambda i: (0, 0)),         # fc1 (resident)
            pl.BlockSpec((1, 50), lambda i: (0, 0)),
            pl.BlockSpec((50, 10), lambda i: (0, 0)),          # fc2 (resident)
            pl.BlockSpec((1, 10), lambda i: (0, 0)),
        ],
        out_specs=pl.BlockSpec((bb, 10), lambda i: (i, 0)),
        compiler_params=pltpu.CompilerParams(
            dimension_semantics=("parallel",)),
    )(x, prepared["t1"], prepared["b1"], prepared["t2"], prepared["b2"],
      prepared["wf1"], prepared["bf1"], prepared["wf2"], prepared["bf2"])
    return out[:n]


if __name__ == "__main__":
    key = jax.random.PRNGKey(0)
    k_x, k_p = jax.random.split(key)
    # MNIST-shaped input is required by the 320-wide flatten (20 * 4 * 4).
    x = jax.random.normal(k_x, (2, 1, 28, 28), dtype=jnp.float32)
    params = init_params(k_p)
    prepared = prepare_params(params)   # one-time weight re-layout (not per call)

    out = net_forward(x, prepared)
    out = jax.block_until_ready(out)

    assert out.shape == (2, 10)
    # log_softmax rows should (approximately) sum to 1 in probability space.
    assert jnp.allclose(jnp.sum(jnp.exp(out), axis=-1), 1.0, atol=1e-3)
    print("KERNEL_OK")
</pallas_src>

<mosaic_0001>
module attributes {stable_mosaic.version = 11 : i64} {
  func.func @_fused_net_kernel(%arg0: i32, %arg1: memref<2x28x28xf32, #tpu.memory_space<vmem>>, %arg2: memref<140x240xbf16, #tpu.memory_space<vmem>>, %arg3: memref<1x240xf32, #tpu.memory_space<vmem>>, %arg4: memref<600x160xbf16, #tpu.memory_space<vmem>>, %arg5: memref<1x160xf32, #tpu.memory_space<vmem>>, %arg6: memref<320x50xbf16, #tpu.memory_space<vmem>>, %arg7: memref<1x50xf32, #tpu.memory_space<vmem>>, %arg8: memref<50x10xbf16, #tpu.memory_space<vmem>>, %arg9: memref<1x10xf32, #tpu.memory_space<vmem>>, %arg10: memref<2x10xf32, #tpu.memory_space<vmem>>) attributes {dimension_semantics = [#tpu.dimension_semantics<parallel>], iteration_bounds = array<i64: 1>, scalar_prefetch = 0 : i64, scratch_operands = 0 : i64, tpu.core_type = #tpu.core_type<tc>, window_params = [{transform_indices = @transform_0, window_bounds = array<i64: 2, 28, 28>}, {pipeline_mode = #tpu.pipeline_mode<synchronous>, transform_indices = @transform_1, window_bounds = array<i64: 140, 240>}, {pipeline_mode = #tpu.pipeline_mode<synchronous>, transform_indices = @transform_2, window_bounds = array<i64: 1, 240>}, {pipeline_mode = #tpu.pipeline_mode<synchronous>, transform_indices = @transform_3, window_bounds = array<i64: 600, 160>}, {pipeline_mode = #tpu.pipeline_mode<synchronous>, transform_indices = @transform_4, window_bounds = array<i64: 1, 160>}, {pipeline_mode = #tpu.pipeline_mode<synchronous>, transform_indices = @transform_5, window_bounds = array<i64: 320, 50>}, {pipeline_mode = #tpu.pipeline_mode<synchronous>, transform_indices = @transform_6, window_bounds = array<i64: 1, 50>}, {pipeline_mode = #tpu.pipeline_mode<synchronous>, transform_indices = @transform_7, window_bounds = array<i64: 50, 10>}, {pipeline_mode = #tpu.pipeline_mode<synchronous>, transform_indices = @transform_8, window_bounds = array<i64: 1, 10>}, {transform_indices = @transform_9, window_bounds = array<i64: 2, 10>}]} {
    %c0 = arith.constant 0 : index
    %c0_0 = arith.constant 0 : index
    %c0_1 = arith.constant 0 : index
    %0 = vector.load %arg1[%c0, %c0_0, %c0_1] : memref<2x28x28xf32, #tpu.memory_space<vmem>>, vector<1x28x28xf32>
    %1 = vector.shape_cast %0 : vector<1x28x28xf32> to vector<28x28xf32>
    %2 = vector.extract_strided_slice %1 {offsets = [0, 0], sizes = [24, 28], strides = [1, 1]} : vector<28x28xf32> to vector<24x28xf32>
    %3 = vector.extract_strided_slice %1 {offsets = [1, 0], sizes = [24, 28], strides = [1, 1]} : vector<28x28xf32> to vector<24x28xf32>
    %4 = vector.extract_strided_slice %1 {offsets = [2, 0], sizes = [24, 28], strides = [1, 1]} : vector<28x28xf32> to vector<24x28xf32>
    %5 = vector.extract_strided_slice %1 {offsets = [3, 0], sizes = [24, 28], strides = [1, 1]} : vector<28x28xf32> to vector<24x28xf32>
    %6 = vector.extract_strided_slice %1 {offsets = [4, 0], sizes = [24, 28], strides = [1, 1]} : vector<28x28xf32> to vector<24x28xf32>
    %7 = tpu.concatenate %2, %3, %4, %5, %6 in 1 : vector<24x28xf32>, vector<24x28xf32>, vector<24x28xf32>, vector<24x28xf32>, vector<24x28xf32> -> vector<24x140xf32>
    %c1 = arith.constant 1 : index
    %c0_2 = arith.constant 0 : index
    %c0_3 = arith.constant 0 : index
    %8 = vector.load %arg1[%c1, %c0_2, %c0_3] : memref<2x28x28xf32, #tpu.memory_space<vmem>>, vector<1x28x28xf32>
    %9 = vector.shape_cast %8 : vector<1x28x28xf32> to vector<28x28xf32>
    %10 = vector.extract_strided_slice %9 {offsets = [0, 0], sizes = [24, 28], strides = [1, 1]} : vector<28x28xf32> to vector<24x28xf32>
    %11 = vector.extract_strided_slice %9 {offsets = [1, 0], sizes = [24, 28], strides = [1, 1]} : vector<28x28xf32> to vector<24x28xf32>
    %12 = vector.extract_strided_slice %9 {offsets = [2, 0], sizes = [24, 28], strides = [1, 1]} : vector<28x28xf32> to vector<24x28xf32>
    %13 = vector.extract_strided_slice %9 {offsets = [3, 0], sizes = [24, 28], strides = [1, 1]} : vector<28x28xf32> to vector<24x28xf32>
    %14 = vector.extract_strided_slice %9 {offsets = [4, 0], sizes = [24, 28], strides = [1, 1]} : vector<28x28xf32> to vector<24x28xf32>
    %15 = tpu.concatenate %10, %11, %12, %13, %14 in 1 : vector<24x28xf32>, vector<24x28xf32>, vector<24x28xf32>, vector<24x28xf32>, vector<24x28xf32> -> vector<24x140xf32>
    %16 = tpu.concatenate %7, %15 in 0 : vector<24x140xf32>, vector<24x140xf32> -> vector<48x140xf32>
    %17 = arith.truncf %16 : vector<48x140xf32> to vector<48x140xbf16>
    %c0_4 = arith.constant 0 : index
    %c0_5 = arith.constant 0 : index
    %18 = vector.load %arg2[%c0_4, %c0_5] : memref<140x240xbf16, #tpu.memory_space<vmem>>, vector<140x240xbf16>
    %cst = arith.constant dense<0.000000e+00> : vector<48x240xf32>
    %19 = tpu.matmul %17, %18, %cst {dimension_numbers = #tpu.dot_dimension_numbers<[1], [0], [0], [1], [0, 0, 1, 1], [], []>} : vector<48x140xbf16>, vector<140x240xbf16>, vector<48x240xf32> -> vector<48x240xf32>
    %c0_6 = arith.constant 0 : index
    %c0_7 = arith.constant 0 : index
    %20 = vector.load %arg3[%c0_6, %c0_7] : memref<1x240xf32, #tpu.memory_space<vmem>>, vector<1x240xf32>
    %21 = vector.broadcast %20 : vector<1x240xf32> to vector<48x240xf32>
    %22 = arith.addf %19, %21 : vector<48x240xf32>
    %23 = vector.extract_strided_slice %22 {offsets = [0, 0], sizes = [24, 240], strides = [1, 1]} : vector<48x240xf32> to vector<24x240xf32>
    %24 = vector.extract_strided_slice %23 {offsets = [0, 0], sizes = [1, 240], strides = [1, 1]} : vector<24x240xf32> to vector<1x240xf32>
    %25 = vector.extract_strided_slice %23 {offsets = [1, 0], sizes = [1, 240], strides = [1, 1]} : vector<24x240xf32> to vector<1x240xf32>
    %26 = arith.maximumf %24, %25 : vector<1x240xf32>
    %27 = vector.extract_strided_slice %23 {offsets = [2, 0], sizes = [1, 240], strides = [1, 1]} : vector<24x240xf32> to vector<1x240xf32>
    %28 = vector.extract_strided_slice %23 {offsets = [3, 0], sizes = [1, 240], strides = [1, 1]} : vector<24x240xf32> to vector<1x240xf32>
    %29 = arith.maximumf %27, %28 : vector<1x240xf32>
    %30 = vector.extract_strided_slice %23 {offsets = [4, 0], sizes = [1, 240], strides = [1, 1]} : vector<24x240xf32> to vector<1x240xf32>
    %31 = vector.extract_strided_slice %23 {offsets = [5, 0], sizes = [1, 240], strides = [1, 1]} : vector<24x240xf32> to vector<1x240xf32>
    %32 = arith.maximumf %30, %31 : vector<1x240xf32>
    %33 = vector.extract_strided_slice %23 {offsets = [6, 0], sizes = [1, 240], strides = [1, 1]} : vector<24x240xf32> to vector<1x240xf32>
    %34 = vector.extract_strided_slice %23 {offsets = [7, 0], sizes = [1, 240], strides = [1, 1]} : vector<24x240xf32> to vector<1x240xf32>
    %35 = arith.maximumf %33, %34 : vector<1x240xf32>
    %36 = vector.extract_strided_slice %23 {offsets = [8, 0], sizes = [1, 240], strides = [1, 1]} : vector<24x240xf32> to vector<1x240xf32>
    %37 = vector.extract_strided_slice %23 {offsets = [9, 0], sizes = [1, 240], strides = [1, 1]} : vector<24x240xf32> to vector<1x240xf32>
    %38 = arith.maximumf %36, %37 : vector<1x240xf32>
    %39 = vector.extract_strided_slice %23 {offsets = [10, 0], sizes = [1, 240], strides = [1, 1]} : vector<24x240xf32> to vector<1x240xf32>
    %40 = vector.extract_strided_slice %23 {offsets = [11, 0], sizes = [1, 240], strides = [1, 1]} : vector<24x240xf32> to vector<1x240xf32>
    %41 = arith.maximumf %39, %40 : vector<1x240xf32>
    %42 = vector.extract_strided_slice %23 {offsets = [12, 0], sizes = [1, 240], strides = [1, 1]} : vector<24x240xf32> to vector<1x240xf32>
    %43 = vector.extract_strided_slice %23 {offsets = [13, 0], sizes = [1, 240], strides = [1, 1]} : vector<24x240xf32> to vector<1x240xf32>
    %44 = arith.maximumf %42, %43 : vector<1x240xf32>
    %45 = vector.extract_strided_slice %23 {offsets = [14, 0], sizes = [1, 240], strides = [1, 1]} : vector<24x240xf32> to vector<1x240xf32>
    %46 = vector.extract_strided_slice %23 {offsets = [15, 0], sizes = [1, 240], strides = [1, 1]} : vector<24x240xf32> to vector<1x240xf32>
    %47 = arith.maximumf %45, %46 : vector<1x240xf32>
    %48 = vector.extract_strided_slice %23 {offsets = [16, 0], sizes = [1, 240], strides = [1, 1]} : vector<24x240xf32> to vector<1x240xf32>
    %49 = vector.extract_strided_slice %23 {offsets = [17, 0], sizes = [1, 240], strides = [1, 1]} : vector<24x240xf32> to vector<1x240xf32>
    %50 = arith.maximumf %48, %49 : vector<1x240xf32>
    %51 = vector.extract_strided_slice %23 {offsets = [18, 0], sizes = [1, 240], strides = [1, 1]} : vector<24x240xf32> to vector<1x240xf32>
    %52 = vector.extract_strided_slice %23 {offsets = [19, 0], sizes = [1, 240], strides = [1, 1]} : vector<24x240xf32> to vector<1x240xf32>
    %53 = arith.maximumf %51, %52 : vector<1x240xf32>
    %54 = vector.extract_strided_slice %23 {offsets = [20, 0], sizes = [1, 240], strides = [1, 1]} : vector<24x240xf32> to vector<1x240xf32>
    %55 = vector.extract_strided_slice %23 {offsets = [21, 0], sizes = [1, 240], strides = [1, 1]} : vector<24x240xf32> to vector<1x240xf32>
    %56 = arith.maximumf %54, %55 : vector<1x240xf32>
    %57 = vector.extract_strided_slice %23 {offsets = [22, 0], sizes = [1, 240], strides = [1, 1]} : vector<24x240xf32> to vector<1x240xf32>
    %58 = vector.extract_strided_slice %23 {offsets = [23, 0], sizes = [1, 240], strides = [1, 1]} : vector<24x240xf32> to vector<1x240xf32>
    %59 = arith.maximumf %57, %58 : vector<1x240xf32>
    %60 = tpu.concatenate %26, %29, %32, %35, %38, %41, %44, %47, %50, %53, %56, %59 in 0 : vector<1x240xf32>, vector<1x240xf32>, vector<1x240xf32>, vector<1x240xf32>, vector<1x240xf32>, vector<1x240xf32>, vector<1x240xf32>, vector<1x240xf32>, vector<1x240xf32>, vector<1x240xf32>, vector<1x240xf32>, vector<1x240xf32> -> vector<12x240xf32>
    %61 = vector.extract_strided_slice %60 {offsets = [0, 0], sizes = [12, 10], strides = [1, 1]} : vector<12x240xf32> to vector<12x10xf32>
    %62 = vector.extract_strided_slice %60 {offsets = [0, 10], sizes = [12, 10], strides = [1, 1]} : vector<12x240xf32> to vector<12x10xf32>
    %63 = arith.maximumf %61, %62 : vector<12x10xf32>
    %64 = vector.extract_strided_slice %60 {offsets = [0, 20], sizes = [12, 10], strides = [1, 1]} : vector<12x240xf32> to vector<12x10xf32>
    %65 = vector.extract_strided_slice %60 {offsets = [0, 30], sizes = [12, 10], strides = [1, 1]} : vector<12x240xf32> to vector<12x10xf32>
    %66 = arith.maximumf %64, %65 : vector<12x10xf32>
    %67 = vector.extract_strided_slice %60 {offsets = [0, 40], sizes = [12, 10], strides = [1, 1]} : vector<12x240xf32> to vector<12x10xf32>
    %68 = vector.extract_strided_slice %60 {offsets = [0, 50], sizes = [12, 10], strides = [1, 1]} : vector<12x240xf32> to vector<12x10xf32>
    %69 = arith.maximumf %67, %68 : vector<12x10xf32>
    %70 = vector.extract_strided_slice %60 {offsets = [0, 60], sizes = [12, 10], strides = [1, 1]} : vector<12x240xf32> to vector<12x10xf32>
    %71 = vector.extract_strided_slice %60 {offsets = [0, 70], sizes = [12, 10], strides = [1, 1]} : vector<12x240xf32> to vector<12x10xf32>
    %72 = arith.maximumf %70, %71 : vector<12x10xf32>
    %73 = vector.extract_strided_slice %60 {offsets = [0, 80], sizes = [12, 10], strides = [1, 1]} : vector<12x240xf32> to vector<12x10xf32>
    %74 = vector.extract_strided_slice %60 {offsets = [0, 90], sizes = [12, 10], strides = [1, 1]} : vector<12x240xf32> to vector<12x10xf32>
    %75 = arith.maximumf %73, %74 : vector<12x10xf32>
    %76 = vector.extract_strided_slice %60 {offsets = [0, 100], sizes = [12, 10], strides = [1, 1]} : vector<12x240xf32> to vector<12x10xf32>
    %77 = vector.extract_strided_slice %60 {offsets = [0, 110], sizes = [12, 10], strides = [1, 1]} : vector<12x240xf32> to vector<12x10xf32>
    %78 = arith.maximumf %76, %77 : vector<12x10xf32>
    %79 = vector.extract_strided_slice %60 {offsets = [0, 120], sizes = [12, 10], strides = [1, 1]} : vector<12x240xf32> to vector<12x10xf32>
    %80 = vector.extract_strided_slice %60 {offsets = [0, 130], sizes = [12, 10], strides = [1, 1]} : vector<12x240xf32> to vector<12x10xf32>
    %81 = arith.maximumf %79, %80 : vector<12x10xf32>
    %82 = vector.extract_strided_slice %60 {offsets = [0, 140], sizes = [12, 10], strides = [1, 1]} : vector<12x240xf32> to vector<12x10xf32>
    %83 = vector.extract_strided_slice %60 {offsets = [0, 150], sizes = [12, 10], strides = [1, 1]} : vector<12x240xf32> to vector<12x10xf32>
    %84 = arith.maximumf %82, %83 : vector<12x10xf32>
    %85 = vector.extract_strided_slice %60 {offsets = [0, 160], sizes = [12, 10], strides = [1, 1]} : vector<12x240xf32> to vector<12x10xf32>
    %86 = vector.extract_strided_slice %60 {offsets = [0, 170], sizes = [12, 10], strides = [1, 1]} : vector<12x240xf32> to vector<12x10xf32>
    %87 = arith.maximumf %85, %86 : vector<12x10xf32>
    %88 = vector.extract_strided_slice %60 {offsets = [0, 180], sizes = [12, 10], strides = [1, 1]} : vector<12x240xf32> to vector<12x10xf32>
    %89 = vector.extract_strided_slice %60 {offsets = [0, 190], sizes = [12, 10], strides = [1, 1]} : vector<12x240xf32> to vector<12x10xf32>
    %90 = arith.maximumf %88, %89 : vector<12x10xf32>
    %91 = vector.extract_strided_slice %60 {offsets = [0, 200], sizes = [12, 10], strides = [1, 1]} : vector<12x240xf32> to vector<12x10xf32>
    %92 = vector.extract_strided_slice %60 {offsets = [0, 210], sizes = [12, 10], strides = [1, 1]} : vector<12x240xf32> to vector<12x10xf32>
    %93 = arith.maximumf %91, %92 : vector<12x10xf32>
    %94 = vector.extract_strided_slice %60 {offsets = [0, 220], sizes = [12, 10], strides = [1, 1]} : vector<12x240xf32> to vector<12x10xf32>
    %95 = vector.extract_strided_slice %60 {offsets = [0, 230], sizes = [12, 10], strides = [1, 1]} : vector<12x240xf32> to vector<12x10xf32>
    %96 = arith.maximumf %94, %95 : vector<12x10xf32>
    %97 = tpu.concatenate %63, %66, %69, %72, %75, %78, %81, %84, %87, %90, %93, %96 in 1 : vector<12x10xf32>, vector<12x10xf32>, vector<12x10xf32>, vector<12x10xf32>, vector<12x10xf32>, vector<12x10xf32>, vector<12x10xf32>, vector<12x10xf32>, vector<12x10xf32>, vector<12x10xf32>, vector<12x10xf32>, vector<12x10xf32> -> vector<12x120xf32>
    %cst_8 = arith.constant 0.000000e+00 : f32
    %98 = vector.broadcast %cst_8 : f32 to vector<12x120xf32>
    %99 = arith.maximumf %97, %98 : vector<12x120xf32>
    %100 = vector.extract_strided_slice %99 {offsets = [0, 0], sizes = [8, 120], strides = [1, 1]} : vector<12x120xf32> to vector<8x120xf32>
    %101 = vector.extract_strided_slice %99 {offsets = [1, 0], sizes = [8, 120], strides = [1, 1]} : vector<12x120xf32> to vector<8x120xf32>
    %102 = vector.extract_strided_slice %99 {offsets = [2, 0], sizes = [8, 120], strides = [1, 1]} : vector<12x120xf32> to vector<8x120xf32>
    %103 = vector.extract_strided_slice %99 {offsets = [3, 0], sizes = [8, 120], strides = [1, 1]} : vector<12x120xf32> to vector<8x120xf32>
    %104 = vector.extract_strided_slice %99 {offsets = [4, 0], sizes = [8, 120], strides = [1, 1]} : vector<12x120xf32> to vector<8x120xf32>
    %105 = tpu.concatenate %100, %101, %102, %103, %104 in 1 : vector<8x120xf32>, vector<8x120xf32>, vector<8x120xf32>, vector<8x120xf32>, vector<8x120xf32> -> vector<8x600xf32>
    %106 = vector.extract_strided_slice %22 {offsets = [24, 0], sizes = [24, 240], strides = [1, 1]} : vector<48x240xf32> to vector<24x240xf32>
    %107 = vector.extract_strided_slice %106 {offsets = [0, 0], sizes = [1, 240], strides = [1, 1]} : vector<24x240xf32> to vector<1x240xf32>
    %108 = vector.extract_strided_slice %106 {offsets = [1, 0], sizes = [1, 240], strides = [1, 1]} : vector<24x240xf32> to vector<1x240xf32>
    %109 = arith.maximumf %107, %108 : vector<1x240xf32>
    %110 = vector.extract_strided_slice %106 {offsets = [2, 0], sizes = [1, 240], strides = [1, 1]} : vector<24x240xf32> to vector<1x240xf32>
    %111 = vector.extract_strided_slice %106 {offsets = [3, 0], sizes = [1, 240], strides = [1, 1]} : vector<24x240xf32> to vector<1x240xf32>
    %112 = arith.maximumf %110, %111 : vector<1x240xf32>
    %113 = vector.extract_strided_slice %106 {offsets = [4, 0], sizes = [1, 240], strides = [1, 1]} : vector<24x240xf32> to vector<1x240xf32>
    %114 = vector.extract_strided_slice %106 {offsets = [5, 0], sizes = [1, 240], strides = [1, 1]} : vector<24x240xf32> to vector<1x240xf32>
    %115 = arith.maximumf %113, %114 : vector<1x240xf32>
    %116 = vector.extract_strided_slice %106 {offsets = [6, 0], sizes = [1, 240], strides = [1, 1]} : vector<24x240xf32> to vector<1x240xf32>
    %117 = vector.extract_strided_slice %106 {offsets = [7, 0], sizes = [1, 240], strides = [1, 1]} : vector<24x240xf32> to vector<1x240xf32>
    %118 = arith.maximumf %116, %117 : vector<1x240xf32>
    %119 = vector.extract_strided_slice %106 {offsets = [8, 0], sizes = [1, 240], strides = [1, 1]} : vector<24x240xf32> to vector<1x240xf32>
    %120 = vector.extract_strided_slice %106 {offsets = [9, 0], sizes = [1, 240], strides = [1, 1]} : vector<24x240xf32> to vector<1x240xf32>
    %121 = arith.maximumf %119, %120 : vector<1x240xf32>
    %122 = vector.extract_strided_slice %106 {offsets = [10, 0], sizes = [1, 240], strides = [1, 1]} : vector<24x240xf32> to vector<1x240xf32>
    %123 = vector.extract_strided_slice %106 {offsets = [11, 0], sizes = [1, 240], strides = [1, 1]} : vector<24x240xf32> to vector<1x240xf32>
    %124 = arith.maximumf %122, %123 : vector<1x240xf32>
    %125 = vector.extract_strided_slice %106 {offsets = [12, 0], sizes = [1, 240], strides = [1, 1]} : vector<24x240xf32> to vector<1x240xf32>
    %126 = vector.extract_strided_slice %106 {offsets = [13, 0], sizes = [1, 240], strides = [1, 1]} : vector<24x240xf32> to vector<1x240xf32>
    %127 = arith.maximumf %125, %126 : vector<1x240xf32>
    %128 = vector.extract_strided_slice %106 {offsets = [14, 0], sizes = [1, 240], strides = [1, 1]} : vector<24x240xf32> to vector<1x240xf32>
    %129 = vector.extract_strided_slice %106 {offsets = [15, 0], sizes = [1, 240], strides = [1, 1]} : vector<24x240xf32> to vector<1x240xf32>
    %130 = arith.maximumf %128, %129 : vector<1x240xf32>
    %131 = vector.extract_strided_slice %106 {offsets = [16, 0], sizes = [1, 240], strides = [1, 1]} : vector<24x240xf32> to vector<1x240xf32>
    %132 = vector.extract_strided_slice %106 {offsets = [17, 0], sizes = [1, 240], strides = [1, 1]} : vector<24x240xf32> to vector<1x240xf32>
    %133 = arith.maximumf %131, %132 : vector<1x240xf32>
    %134 = vector.extract_strided_slice %106 {offsets = [18, 0], sizes = [1, 240], strides = [1, 1]} : vector<24x240xf32> to vector<1x240xf32>
    %135 = vector.extract_strided_slice %106 {offsets = [19, 0], sizes = [1, 240], strides = [1, 1]} : vector<24x240xf32> to vector<1x240xf32>
    %136 = arith.maximumf %134, %135 : vector<1x240xf32>
    %137 = vector.extract_strided_slice %106 {offsets = [20, 0], sizes = [1, 240], strides = [1, 1]} : vector<24x240xf32> to vector<1x240xf32>
    %138 = vector.extract_strided_slice %106 {offsets = [21, 0], sizes = [1, 240], strides = [1, 1]} : vector<24x240xf32> to vector<1x240xf32>
    %139 = arith.maximumf %137, %138 : vector<1x240xf32>
    %140 = vector.extract_strided_slice %106 {offsets = [22, 0], sizes = [1, 240], strides = [1, 1]} : vector<24x240xf32> to vector<1x240xf32>
    %141 = vector.extract_strided_slice %106 {offsets = [23, 0], sizes = [1, 240], strides = [1, 1]} : vector<24x240xf32> to vector<1x240xf32>
    %142 = arith.maximumf %140, %141 : vector<1x240xf32>
    %143 = tpu.concatenate %109, %112, %115, %118, %121, %124, %127, %130, %133, %136, %139, %142 in 0 : vector<1x240xf32>, vector<1x240xf32>, vector<1x240xf32>, vector<1x240xf32>, vector<1x240xf32>, vector<1x240xf32>, vector<1x240xf32>, vector<1x240xf32>, vector<1x240xf32>, vector<1x240xf32>, vector<1x240xf32>, vector<1x240xf32> -> vector<12x240xf32>
    %144 = vector.extract_strided_slice %143 {offsets = [0, 0], sizes = [12, 10], strides = [1, 1]} : vector<12x240xf32> to vector<12x10xf32>
    %145 = vector.extract_strided_slice %143 {offsets = [0, 10], sizes = [12, 10], strides = [1, 1]} : vector<12x240xf32> to vector<12x10xf32>
    %146 = arith.maximumf %144, %145 : vector<12x10xf32>
    %147 = vector.extract_strided_slice %143 {offsets = [0, 20], sizes = [12, 10], strides = [1, 1]} : vector<12x240xf32> to vector<12x10xf32>
    %148 = vector.extract_strided_slice %143 {offsets = [0, 30], sizes = [12, 10], strides = [1, 1]} : vector<12x240xf32> to vector<12x10xf32>
    %149 = arith.maximumf %147, %148 : vector<12x10xf32>
    %150 = vector.extract_strided_slice %143 {offsets = [0, 40], sizes = [12, 10], strides = [1, 1]} : vector<12x240xf32> to vector<12x10xf32>
    %151 = vector.extract_strided_slice %143 {offsets = [0, 50], sizes = [12, 10], strides = [1, 1]} : vector<12x240xf32> to vector<12x10xf32>
    %152 = arith.maximumf %150, %151 : vector<12x10xf32>
    %153 = vector.extract_strided_slice %143 {offsets = [0, 60], sizes = [12, 10], strides = [1, 1]} : vector<12x240xf32> to vector<12x10xf32>
    %154 = vector.extract_strided_slice %143 {offsets = [0, 70], sizes = [12, 10], strides = [1, 1]} : vector<12x240xf32> to vector<12x10xf32>
    %155 = arith.maximumf %153, %154 : vector<12x10xf32>
    %156 = vector.extract_strided_slice %143 {offsets = [0, 80], sizes = [12, 10], strides = [1, 1]} : vector<12x240xf32> to vector<12x10xf32>
    %157 = vector.extract_strided_slice %143 {offsets = [0, 90], sizes = [12, 10], strides = [1, 1]} : vector<12x240xf32> to vector<12x10xf32>
    %158 = arith.maximumf %156, %157 : vector<12x10xf32>
    %159 = vector.extract_strided_slice %143 {offsets = [0, 100], sizes = [12, 10], strides = [1, 1]} : vector<12x240xf32> to vector<12x10xf32>
    %160 = vector.extract_strided_slice %143 {offsets = [0, 110], sizes = [12, 10], strides = [1, 1]} : vector<12x240xf32> to vector<12x10xf32>
    %161 = arith.maximumf %159, %160 : vector<12x10xf32>
    %162 = vector.extract_strided_slice %143 {offsets = [0, 120], sizes = [12, 10], strides = [1, 1]} : vector<12x240xf32> to vector<12x10xf32>
    %163 = vector.extract_strided_slice %143 {offsets = [0, 130], sizes = [12, 10], strides = [1, 1]} : vector<12x240xf32> to vector<12x10xf32>
    %164 = arith.maximumf %162, %163 : vector<12x10xf32>
    %165 = vector.extract_strided_slice %143 {offsets = [0, 140], sizes = [12, 10], strides = [1, 1]} : vector<12x240xf32> to vector<12x10xf32>
    %166 = vector.extract_strided_slice %143 {offsets = [0, 150], sizes = [12, 10], strides = [1, 1]} : vector<12x240xf32> to vector<12x10xf32>
    %167 = arith.maximumf %165, %166 : vector<12x10xf32>
    %168 = vector.extract_strided_slice %143 {offsets = [0, 160], sizes = [12, 10], strides = [1, 1]} : vector<12x240xf32> to vector<12x10xf32>
    %169 = vector.extract_strided_slice %143 {offsets = [0, 170], sizes = [12, 10], strides = [1, 1]} : vector<12x240xf32> to vector<12x10xf32>
    %170 = arith.maximumf %168, %169 : vector<12x10xf32>
    %171 = vector.extract_strided_slice %143 {offsets = [0, 180], sizes = [12, 10], strides = [1, 1]} : vector<12x240xf32> to vector<12x10xf32>
    %172 = vector.extract_strided_slice %143 {offsets = [0, 190], sizes = [12, 10], strides = [1, 1]} : vector<12x240xf32> to vector<12x10xf32>
    %173 = arith.maximumf %171, %172 : vector<12x10xf32>
    %174 = vector.extract_strided_slice %143 {offsets = [0, 200], sizes = [12, 10], strides = [1, 1]} : vector<12x240xf32> to vector<12x10xf32>
    %175 = vector.extract_strided_slice %143 {offsets = [0, 210], sizes = [12, 10], strides = [1, 1]} : vector<12x240xf32> to vector<12x10xf32>
    %176 = arith.maximumf %174, %175 : vector<12x10xf32>
    %177 = vector.extract_strided_slice %143 {offsets = [0, 220], sizes = [12, 10], strides = [1, 1]} : vector<12x240xf32> to vector<12x10xf32>
    %178 = vector.extract_strided_slice %143 {offsets = [0, 230], sizes = [12, 10], strides = [1, 1]} : vector<12x240xf32> to vector<12x10xf32>
    %179 = arith.maximumf %177, %178 : vector<12x10xf32>
    %180 = tpu.concatenate %146, %149, %152, %155, %158, %161, %164, %167, %170, %173, %176, %179 in 1 : vector<12x10xf32>, vector<12x10xf32>, vector<12x10xf32>, vector<12x10xf32>, vector<12x10xf32>, vector<12x10xf32>, vector<12x10xf32>, vector<12x10xf32>, vector<12x10xf32>, vector<12x10xf32>, vector<12x10xf32>, vector<12x10xf32> -> vector<12x120xf32>
    %cst_9 = arith.constant 0.000000e+00 : f32
    %181 = vector.broadcast %cst_9 : f32 to vector<12x120xf32>
    %182 = arith.maximumf %180, %181 : vector<12x120xf32>
    %183 = vector.extract_strided_slice %182 {offsets = [0, 0], sizes = [8, 120], strides = [1, 1]} : vector<12x120xf32> to vector<8x120xf32>
    %184 = vector.extract_strided_slice %182 {offsets = [1, 0], sizes = [8, 120], strides = [1, 1]} : vector<12x120xf32> to vector<8x120xf32>
    %185 = vector.extract_strided_slice %182 {offsets = [2, 0], sizes = [8, 120], strides = [1, 1]} : vector<12x120xf32> to vector<8x120xf32>
    %186 = vector.extract_strided_slice %182 {offsets = [3, 0], sizes = [8, 120], strides = [1, 1]} : vector<12x120xf32> to vector<8x120xf32>
    %187 = vector.extract_strided_slice %182 {offsets = [4, 0], sizes = [8, 120], strides = [1, 1]} : vector<12x120xf32> to vector<8x120xf32>
    %188 = tpu.concatenate %183, %184, %185, %186, %187 in 1 : vector<8x120xf32>, vector<8x120xf32>, vector<8x120xf32>, vector<8x120xf32>, vector<8x120xf32> -> vector<8x600xf32>
    %189 = tpu.concatenate %105, %188 in 0 : vector<8x600xf32>, vector<8x600xf32> -> vector<16x600xf32>
    %190 = arith.truncf %189 : vector<16x600xf32> to vector<16x600xbf16>
    %c0_10 = arith.constant 0 : index
    %c0_11 = arith.constant 0 : index
    %191 = vector.load %arg4[%c0_10, %c0_11] : memref<600x160xbf16, #tpu.memory_space<vmem>>, vector<600x160xbf16>
    %cst_12 = arith.constant dense<0.000000e+00> : vector<16x160xf32>
    %192 = tpu.matmul %190, %191, %cst_12 {dimension_numbers = #tpu.dot_dimension_numbers<[1], [0], [0], [1], [0, 0, 1, 1], [], []>} : vector<16x600xbf16>, vector<600x160xbf16>, vector<16x160xf32> -> vector<16x160xf32>
    %c0_13 = arith.constant 0 : index
    %c0_14 = arith.constant 0 : index
    %193 = vector.load %arg5[%c0_13, %c0_14] : memref<1x160xf32, #tpu.memory_space<vmem>>, vector<1x160xf32>
    %194 = vector.broadcast %193 : vector<1x160xf32> to vector<16x160xf32>
    %195 = arith.addf %192, %194 : vector<16x160xf32>
    %196 = vector.extract_strided_slice %195 {offsets = [0, 0], sizes = [8, 160], strides = [1, 1]} : vector<16x160xf32> to vector<8x160xf32>
    %197 = vector.extract_strided_slice %196 {offsets = [0, 0], sizes = [1, 160], strides = [1, 1]} : vector<8x160xf32> to vector<1x160xf32>
    %198 = vector.extract_strided_slice %196 {offsets = [1, 0], sizes = [1, 160], strides = [1, 1]} : vector<8x160xf32> to vector<1x160xf32>
    %199 = arith.maximumf %197, %198 : vector<1x160xf32>
    %200 = vector.extract_strided_slice %196 {offsets = [2, 0], sizes = [1, 160], strides = [1, 1]} : vector<8x160xf32> to vector<1x160xf32>
    %201 = vector.extract_strided_slice %196 {offsets = [3, 0], sizes = [1, 160], strides = [1, 1]} : vector<8x160xf32> to vector<1x160xf32>
    %202 = arith.maximumf %200, %201 : vector<1x160xf32>
    %203 = vector.extract_strided_slice %196 {offsets = [4, 0], sizes = [1, 160], strides = [1, 1]} : vector<8x160xf32> to vector<1x160xf32>
    %204 = vector.extract_strided_slice %196 {offsets = [5, 0], sizes = [1, 160], strides = [1, 1]} : vector<8x160xf32> to vector<1x160xf32>
    %205 = arith.maximumf %203, %204 : vector<1x160xf32>
    %206 = vector.extract_strided_slice %196 {offsets = [6, 0], sizes = [1, 160], strides = [1, 1]} : vector<8x160xf32> to vector<1x160xf32>
    %207 = vector.extract_strided_slice %196 {offsets = [7, 0], sizes = [1, 160], strides = [1, 1]} : vector<8x160xf32> to vector<1x160xf32>
    %208 = arith.maximumf %206, %207 : vector<1x160xf32>
    %209 = tpu.concatenate %199, %202, %205, %208 in 0 : vector<1x160xf32>, vector<1x160xf32>, vector<1x160xf32>, vector<1x160xf32> -> vector<4x160xf32>
    %210 = vector.extract_strided_slice %209 {offsets = [0, 0], sizes = [4, 20], strides = [1, 1]} : vector<4x160xf32> to vector<4x20xf32>
    %211 = vector.extract_strided_slice %209 {offsets = [0, 20], sizes = [4, 20], strides = [1, 1]} : vector<4x160xf32> to vector<4x20xf32>
    %212 = arith.maximumf %210, %211 : vector<4x20xf32>
    %213 = vector.extract_strided_slice %209 {offsets = [0, 40], sizes = [4, 20], strides = [1, 1]} : vector<4x160xf32> to vector<4x20xf32>
    %214 = vector.extract_strided_slice %209 {offsets = [0, 60], sizes = [4, 20], strides = [1, 1]} : vector<4x160xf32> to vector<4x20xf32>
    %215 = arith.maximumf %213, %214 : vector<4x20xf32>
    %216 = vector.extract_strided_slice %209 {offsets = [0, 80], sizes = [4, 20], strides = [1, 1]} : vector<4x160xf32> to vector<4x20xf32>
    %217 = vector.extract_strided_slice %209 {offsets = [0, 100], sizes = [4, 20], strides = [1, 1]} : vector<4x160xf32> to vector<4x20xf32>
    %218 = arith.maximumf %216, %217 : vector<4x20xf32>
    %219 = vector.extract_strided_slice %209 {offsets = [0, 120], sizes = [4, 20], strides = [1, 1]} : vector<4x160xf32> to vector<4x20xf32>
    %220 = vector.extract_strided_slice %209 {offsets = [0, 140], sizes = [4, 20], strides = [1, 1]} : vector<4x160xf32> to vector<4x20xf32>
    %221 = arith.maximumf %219, %220 : vector<4x20xf32>
    %222 = tpu.concatenate %212, %215, %218, %221 in 1 : vector<4x20xf32>, vector<4x20xf32>, vector<4x20xf32>, vector<4x20xf32> -> vector<4x80xf32>
    %cst_15 = arith.constant 0.000000e+00 : f32
    %223 = vector.broadcast %cst_15 : f32 to vector<4x80xf32>
    %224 = arith.maximumf %222, %223 : vector<4x80xf32>
    %225 = vector.extract_strided_slice %224 {offsets = [0, 0], sizes = [1, 80], strides = [1, 1]} : vector<4x80xf32> to vector<1x80xf32>
    %226 = vector.extract_strided_slice %224 {offsets = [1, 0], sizes = [1, 80], strides = [1, 1]} : vector<4x80xf32> to vector<1x80xf32>
    %227 = vector.extract_strided_slice %224 {offsets = [2, 0], sizes = [1, 80], strides = [1, 1]} : vector<4x80xf32> to vector<1x80xf32>
    %228 = vector.extract_strided_slice %224 {offsets = [3, 0], sizes = [1, 80], strides = [1, 1]} : vector<4x80xf32> to vector<1x80xf32>
    %229 = tpu.concatenate %225, %226, %227, %228 in 1 : vector<1x80xf32>, vector<1x80xf32>, vector<1x80xf32>, vector<1x80xf32> -> vector<1x320xf32>
    %230 = vector.extract_strided_slice %195 {offsets = [8, 0], sizes = [8, 160], strides = [1, 1]} : vector<16x160xf32> to vector<8x160xf32>
    %231 = vector.extract_strided_slice %230 {offsets = [0, 0], sizes = [1, 160], strides = [1, 1]} : vector<8x160xf32> to vector<1x160xf32>
    %232 = vector.extract_strided_slice %230 {offsets = [1, 0], sizes = [1, 160], strides = [1, 1]} : vector<8x160xf32> to vector<1x160xf32>
    %233 = arith.maximumf %231, %232 : vector<1x160xf32>
    %234 = vector.extract_strided_slice %230 {offsets = [2, 0], sizes = [1, 160], strides = [1, 1]} : vector<8x160xf32> to vector<1x160xf32>
    %235 = vector.extract_strided_slice %230 {offsets = [3, 0], sizes = [1, 160], strides = [1, 1]} : vector<8x160xf32> to vector<1x160xf32>
    %236 = arith.maximumf %234, %235 : vector<1x160xf32>
    %237 = vector.extract_strided_slice %230 {offsets = [4, 0], sizes = [1, 160], strides = [1, 1]} : vector<8x160xf32> to vector<1x160xf32>
    %238 = vector.extract_strided_slice %230 {offsets = [5, 0], sizes = [1, 160], strides = [1, 1]} : vector<8x160xf32> to vector<1x160xf32>
    %239 = arith.maximumf %237, %238 : vector<1x160xf32>
    %240 = vector.extract_strided_slice %230 {offsets = [6, 0], sizes = [1, 160], strides = [1, 1]} : vector<8x160xf32> to vector<1x160xf32>
    %241 = vector.extract_strided_slice %230 {offsets = [7, 0], sizes = [1, 160], strides = [1, 1]} : vector<8x160xf32> to vector<1x160xf32>
    %242 = arith.maximumf %240, %241 : vector<1x160xf32>
    %243 = tpu.concatenate %233, %236, %239, %242 in 0 : vector<1x160xf32>, vector<1x160xf32>, vector<1x160xf32>, vector<1x160xf32> -> vector<4x160xf32>
    %244 = vector.extract_strided_slice %243 {offsets = [0, 0], sizes = [4, 20], strides = [1, 1]} : vector<4x160xf32> to vector<4x20xf32>
    %245 = vector.extract_strided_slice %243 {offsets = [0, 20], sizes = [4, 20], strides = [1, 1]} : vector<4x160xf32> to vector<4x20xf32>
    %246 = arith.maximumf %244, %245 : vector<4x20xf32>
    %247 = vector.extract_strided_slice %243 {offsets = [0, 40], sizes = [4, 20], strides = [1, 1]} : vector<4x160xf32> to vector<4x20xf32>
    %248 = vector.extract_strided_slice %243 {offsets = [0, 60], sizes = [4, 20], strides = [1, 1]} : vector<4x160xf32> to vector<4x20xf32>
    %249 = arith.maximumf %247, %248 : vector<4x20xf32>
    %250 = vector.extract_strided_slice %243 {offsets = [0, 80], sizes = [4, 20], strides = [1, 1]} : vector<4x160xf32> to vector<4x20xf32>
    %251 = vector.extract_strided_slice %243 {offsets = [0, 100], sizes = [4, 20], strides = [1, 1]} : vector<4x160xf32> to vector<4x20xf32>
    %252 = arith.maximumf %250, %251 : vector<4x20xf32>
    %253 = vector.extract_strided_slice %243 {offsets = [0, 120], sizes = [4, 20], strides = [1, 1]} : vector<4x160xf32> to vector<4x20xf32>
    %254 = vector.extract_strided_slice %243 {offsets = [0, 140], sizes = [4, 20], strides = [1, 1]} : vector<4x160xf32> to vector<4x20xf32>
    %255 = arith.maximumf %253, %254 : vector<4x20xf32>
    %256 = tpu.concatenate %246, %249, %252, %255 in 1 : vector<4x20xf32>, vector<4x20xf32>, vector<4x20xf32>, vector<4x20xf32> -> vector<4x80xf32>
    %cst_16 = arith.constant 0.000000e+00 : f32
    %257 = vector.broadcast %cst_16 : f32 to vector<4x80xf32>
    %258 = arith.maximumf %256, %257 : vector<4x80xf32>
    %259 = vector.extract_strided_slice %258 {offsets = [0, 0], sizes = [1, 80], strides = [1, 1]} : vector<4x80xf32> to vector<1x80xf32>
    %260 = vector.extract_strided_slice %258 {offsets = [1, 0], sizes = [1, 80], strides = [1, 1]} : vector<4x80xf32> to vector<1x80xf32>
    %261 = vector.extract_strided_slice %258 {offsets = [2, 0], sizes = [1, 80], strides = [1, 1]} : vector<4x80xf32> to vector<1x80xf32>
    %262 = vector.extract_strided_slice %258 {offsets = [3, 0], sizes = [1, 80], strides = [1, 1]} : vector<4x80xf32> to vector<1x80xf32>
    %263 = tpu.concatenate %259, %260, %261, %262 in 1 : vector<1x80xf32>, vector<1x80xf32>, vector<1x80xf32>, vector<1x80xf32> -> vector<1x320xf32>
    %264 = tpu.concatenate %229, %263 in 0 : vector<1x320xf32>, vector<1x320xf32> -> vector<2x320xf32>
    %265 = arith.truncf %264 : vector<2x320xf32> to vector<2x320xbf16>
    %c0_17 = arith.constant 0 : index
    %c0_18 = arith.constant 0 : index
    %266 = vector.load %arg6[%c0_17, %c0_18] : memref<320x50xbf16, #tpu.memory_space<vmem>>, vector<320x50xbf16>
    %cst_19 = arith.constant dense<0.000000e+00> : vector<2x50xf32>
    %267 = tpu.matmul %265, %266, %cst_19 {dimension_numbers = #tpu.dot_dimension_numbers<[1], [0], [0], [1], [0, 0, 1, 1], [], []>} : vector<2x320xbf16>, vector<320x50xbf16>, vector<2x50xf32> -> vector<2x50xf32>
    %c0_20 = arith.constant 0 : index
    %c0_21 = arith.constant 0 : index
    %268 = vector.load %arg7[%c0_20, %c0_21] : memref<1x50xf32, #tpu.memory_space<vmem>>, vector<1x50xf32>
    %269 = vector.broadcast %268 : vector<1x50xf32> to vector<2x50xf32>
    %270 = arith.addf %267, %269 : vector<2x50xf32>
    %cst_22 = arith.constant 0.000000e+00 : f32
    %271 = vector.broadcast %cst_22 : f32 to vector<2x50xf32>
    %272 = arith.maximumf %270, %271 : vector<2x50xf32>
    %273 = arith.truncf %272 : vector<2x50xf32> to vector<2x50xbf16>
    %c0_23 = arith.constant 0 : index
    %c0_24 = arith.constant 0 : index
    %274 = vector.load %arg8[%c0_23, %c0_24] : memref<50x10xbf16, #tpu.memory_space<vmem>>, vector<50x10xbf16>
    %cst_25 = arith.constant dense<0.000000e+00> : vector<2x10xf32>
    %275 = tpu.matmul %273, %274, %cst_25 {dimension_numbers = #tpu.dot_dimension_numbers<[1], [0], [0], [1], [0, 0, 1, 1], [], []>} : vector<2x50xbf16>, vector<50x10xbf16>, vector<2x10xf32> -> vector<2x10xf32>
    %c0_26 = arith.constant 0 : index
    %c0_27 = arith.constant 0 : index
    %276 = vector.load %arg9[%c0_26, %c0_27] : memref<1x10xf32, #tpu.memory_space<vmem>>, vector<1x10xf32>
    %277 = vector.broadcast %276 : vector<1x10xf32> to vector<2x10xf32>
    %278 = arith.addf %275, %277 : vector<2x10xf32>
    %cst_28 = arith.constant dense<0xFF800000> : vector<2xf32>
    %279 = vector.multi_reduction <maximumf>, %278, %cst_28 [1] : vector<2x10xf32> to vector<2xf32>
    %280 = vector.shape_cast %279 : vector<2xf32> to vector<2x1xf32>
    %281 = vector.broadcast %280 : vector<2x1xf32> to vector<2x10xf32>
    %282 = arith.subf %278, %281 : vector<2x10xf32>
    %283 = math.exp %282 : vector<2x10xf32>
    %cst_29 = arith.constant dense<0.000000e+00> : vector<2xf32>
    %284 = vector.multi_reduction <add>, %283, %cst_29 [1] : vector<2x10xf32> to vector<2xf32>
    %285 = vector.shape_cast %284 : vector<2xf32> to vector<2x1xf32>
    %286 = math.log %285 : vector<2x1xf32>
    %287 = vector.broadcast %286 : vector<2x1xf32> to vector<2x10xf32>
    %288 = arith.subf %282, %287 : vector<2x10xf32>
    %c0_30 = arith.constant 0 : index
    %c0_31 = arith.constant 0 : index
    %289 = vector.load %arg10[%c0_30, %c0_31] : memref<2x10xf32, #tpu.memory_space<vmem>>, vector<2x10xf32>
    tpu.vector_store %arg10[%c0_30, %c0_31], %288 {strides = array<i32>} : memref<2x10xf32, #tpu.memory_space<vmem>>, vector<2x10xf32>,
    return
  }
  func.func @transform_0(%arg0: i32) -> (i32, i32, i32) {
    %c0_i32 = arith.constant 0 : i32
    %c0_i32_0 = arith.constant 0 : i32
    %c0_i32_1 = arith.constant 0 : i32
    return %arg0, %c0_i32, %c0_i32_0 : i32, i32, i32
  }
  func.func @transform_1(%arg0: i32) -> (i32, i32) {
    %c0_i32 = arith.constant 0 : i32
    %c0_i32_0 = arith.constant 0 : i32
    %c0_i32_1 = arith.constant 0 : i32
    return %c0_i32, %c0_i32_0 : i32, i32
  }
  func.func @transform_2(%arg0: i32) -> (i32, i32) {
    %c0_i32 = arith.constant 0 : i32
    %c0_i32_0 = arith.constant 0 : i32
    %c0_i32_1 = arith.constant 0 : i32
    return %c0_i32, %c0_i32_0 : i32, i32
  }
  func.func @transform_3(%arg0: i32) -> (i32, i32) {
    %c0_i32 = arith.constant 0 : i32
    %c0_i32_0 = arith.constant 0 : i32
    %c0_i32_1 = arith.constant 0 : i32
    return %c0_i32, %c0_i32_0 : i32, i32
  }
  func.func @transform_4(%arg0: i32) -> (i32, i32) {
    %c0_i32 = arith.constant 0 : i32
    %c0_i32_0 = arith.constant 0 : i32
    %c0_i32_1 = arith.constant 0 : i32
    return %c0_i32, %c0_i32_0 : i32, i32
  }
  func.func @transform_5(%arg0: i32) -> (i32, i32) {
    %c0_i32 = arith.constant 0 : i32
    %c0_i32_0 = arith.constant 0 : i32
    %c0_i32_1 = arith.constant 0 : i32
    return %c0_i32, %c0_i32_0 : i32, i32
  }
  func.func @transform_6(%arg0: i32) -> (i32, i32) {
    %c0_i32 = arith.constant 0 : i32
    %c0_i32_0 = arith.constant 0 : i32
    %c0_i32_1 = arith.constant 0 : i32
    return %c0_i32, %c0_i32_0 : i32, i32
  }
  func.func @transform_7(%arg0: i32) -> (i32, i32) {
    %c0_i32 = arith.constant 0 : i32
    %c0_i32_0 = arith.constant 0 : i32
    %c0_i32_1 = arith.constant 0 : i32
    return %c0_i32, %c0_i32_0 : i32, i32
  }
  func.func @transform_8(%arg0: i32) -> (i32, i32) {
    %c0_i32 = arith.constant 0 : i32
    %c0_i32_0 = arith.constant 0 : i32
    %c0_i32_1 = arith.constant 0 : i32
    return %c0_i32, %c0_i32_0 : i32, i32
  }
  func.func @transform_9(%arg0: i32) -> (i32, i32) {
    %c0_i32 = arith.constant 0 : i32
    %c0_i32_0 = arith.constant 0 : i32
    return %arg0, %c0_i32 : i32, i32
  }
}

</mosaic_0001>

<llo_original>
// kernel: tpu_custom_call.1
$region0: #{tpu_custom_call.1}
  #allocation0 [shape = 'u32[]', space=smem, size = 0x4, offset = 0x4, fixed_abs, tag = 'smem constant byte address 0x4 - core index']
  #allocation1 [shape = 'u32[144,128]{1,0:T(1,128)}', space=vmem, size = 0x12000, scoped, tag = 'internal scratch']
  %s0 = inlined_call_operand.vmem [shape: f32[2,28,28], index: 0, kind: input, shape index: {}]
  %s1 = inlined_call_operand.vmem [shape: bf16[140,240], index: 1, kind: input, shape index: {}]
  %s2 = inlined_call_operand.vmem [shape: f32[1,240], index: 2, kind: input, shape index: {}]
  %s3 = inlined_call_operand.vmem [shape: bf16[600,160], index: 3, kind: input, shape index: {}]
  %s4 = inlined_call_operand.vmem [shape: f32[1,160], index: 4, kind: input, shape index: {}]
  %s5 = inlined_call_operand.vmem [shape: bf16[320,50], index: 5, kind: input, shape index: {}]
  %s6 = inlined_call_operand.vmem [shape: f32[1,50], index: 6, kind: input, shape index: {}]
  %s7 = inlined_call_operand.vmem [shape: bf16[50,10], index: 7, kind: input, shape index: {}]
  %s8 = inlined_call_operand.vmem [shape: f32[1,10], index: 8, kind: input, shape index: {}]
  %s9 = inlined_call_operand.hbm [shape: f32[2,10], index: 9, kind: output, shape index: {}]
  %s10 = sld [smem:[#allocation0]]
  $region46: #{tpu_custom_call.1} parent=0
    _
  %s12 = ssub.s32 1, %s10
  %s13 = scalar_select 0, %s12, %s10
  $region1: #{tpu_custom_call.1} parent=0
    #allocation2 [shape = 'u8[1024]{0}', space=vmem, size = 0x400, scoped, tag = 'output window, operand 0, single buffered']
    #allocation3 [shape = 's32[1]{0}', space=sflag, size = 0x4, scoped, tag = 'scoped memory for tpu_custom_call.1']
    %14 = vsyncpa [#allocation3], 0
    // Predicated region
    $region2: #{tpu_custom_call.1} parent=1 // pred_check
      _
    $region3: #{tpu_custom_call.1} parent=1 // pred_check_branch
      %16 = sbr.rel (0) target = $region5
    $region4: #{tpu_custom_call.1} parent=1 // pred_region
      _
    $region5: #{tpu_custom_call.1} parent=1 // pred_fallthru
      _
    // Predicated region
    $region6: #{tpu_custom_call.1} parent=1 // pred_check
      _
    $region7: #{tpu_custom_call.1} parent=1 // pred_check_branch
      %18 = sbr.rel (0) target = $region9
    $region8: #{tpu_custom_call.1} parent=1 // pred_region
      _
    $region9: #{tpu_custom_call.1} parent=1 // pred_fallthru
      _
    // Predicated region
    $region10: #{tpu_custom_call.1} parent=1 // pred_check
      _
    $region11: #{tpu_custom_call.1} parent=1 // pred_check_branch
      %20 = sbr.rel (0) target = $region13
    $region12: #{tpu_custom_call.1} parent=1 // pred_region
      _
    $region13: #{tpu_custom_call.1} parent=1 // pred_fallthru
      _
    // Predicated region
    $region14: #{tpu_custom_call.1} parent=1 // pred_check
      _
    $region15: #{tpu_custom_call.1} parent=1 // pred_check_branch
      %22 = sbr.rel (0) target = $region17
    $region16: #{tpu_custom_call.1} parent=1 // pred_region
      _
    $region17: #{tpu_custom_call.1} parent=1 // pred_fallthru
      _
    // Predicated region
    $region18: #{tpu_custom_call.1} parent=1 // pred_check
      _
    $region19: #{tpu_custom_call.1} parent=1 // pred_check_branch
      %24 = sbr.rel (0) target = $region21
    $region20: #{tpu_custom_call.1} parent=1 // pred_region
      _
    $region21: #{tpu_custom_call.1} parent=1 // pred_fallthru
      _
    // Predicated region
    $region22: #{tpu_custom_call.1} parent=1 // pred_check
      _
    $region23: #{tpu_custom_call.1} parent=1 // pred_check_branch
      %26 = sbr.rel (0) target = $region25
    $region24: #{tpu_custom_call.1} parent=1 // pred_region
      _
    $region25: #{tpu_custom_call.1} parent=1 // pred_fallthru
      _
    // Predicated region
    $region26: #{tpu_custom_call.1} parent=1 // pred_check
      _
    $region27: #{tpu_custom_call.1} parent=1 // pred_check_branch
      %28 = sbr.rel (0) target = $region29
    $region28: #{tpu_custom_call.1} parent=1 // pred_region
      _
    $region29: #{tpu_custom_call.1} parent=1 // pred_fallthru
      _
    // Predicated region
    $region30: #{tpu_custom_call.1} parent=1 // pred_check
      _
    $region31: #{tpu_custom_call.1} parent=1 // pred_check_branch
      %30 = sbr.rel (0) target = $region33
    $region32: #{tpu_custom_call.1} parent=1 // pred_region
      _
    $region33: #{tpu_custom_call.1} parent=1 // pred_fallthru
      _
    // Predicated region
    $region34: #{tpu_custom_call.1} parent=1 // pred_check
      _
    $region35: #{tpu_custom_call.1} parent=1 // pred_check_branch
      %32 = sbr.rel (0) target = $region37
    $region36: #{tpu_custom_call.1} parent=1 // pred_region
      _
    $region37: #{tpu_custom_call.1} parent=1 // pred_fallthru
      _
    %v34 = vld [vmem:[%s0] sm:$0xff]
    %v35 = vld [vmem:[%s0 + $0x8] sm:$0xff]
    %v36 = vld [vmem:[%s0 + $0x10] sm:$0xff]
    %v37 = vld [vmem:[%s0 + $0x18] sm:$0xf]
    %vm42 = vcmask 1046528
    %v43 = vrot.slane %v34, 1
    %v44 = vrot.slane %v35, 1
    %v45 = vsel %vm42, %v43, %v44
    %v46 = vrot.slane %v36, 1
    %v47 = vsel %vm42, %v44, %v46
    %v48 = vrot.slane %v37, 1
    %v49 = vsel %vm42, %v46, %v48
    %50 = vrot.lane.b32.xlu0 %v45, 28
    %v51 = vpop.permute.xlu0 %50
    %52 = vrot.lane.b32.xlu0 %v47, 28
    %v53 = vpop.permute.xlu0 %52
    %54 = vrot.lane.b32.xlu0 %v49, 28
    %v55 = vpop.permute.xlu0 %54
    %vm59 = vcmask 1045504
    %v60 = vrot.slane %v34, 2
    %v61 = vrot.slane %v35, 2
    %v62 = vsel %vm59, %v60, %v61
    %v63 = vrot.slane %v36, 2
    %v64 = vsel %vm59, %v61, %v63
    %v65 = vrot.slane %v37, 2
    %v66 = vsel %vm59, %v63, %v65
    %67 = vrot.lane.b32.xlu0 %v62, 56
    %v68 = vpop.permute.xlu0 %67
    %69 = vrot.lane.b32.xlu0 %v64, 56
    %v70 = vpop.permute.xlu0 %69
    %71 = vrot.lane.b32.xlu0 %v66, 56
    %v72 = vpop.permute.xlu0 %71
    %vm76 = vcmask 1044480
    %v77 = vrot.slane %v34, 3
    %v78 = vrot.slane %v35, 3
    %v79 = vsel %vm76, %v77, %v78
    %v80 = vrot.slane %v36, 3
    %v81 = vsel %vm76, %v78, %v80
    %v82 = vrot.slane %v37, 3
    %v83 = vsel %vm76, %v80, %v82
    %84 = vrot.lane.b32.xlu0 %v79, 84
    %v85 = vpop.permute.xlu0 %84
    %86 = vrot.lane.b32.xlu0 %v81, 84
    %v87 = vpop.permute.xlu0 %86
    %88 = vrot.lane.b32.xlu0 %v83, 84
    %v89 = vpop.permute.xlu0 %88
    %vm93 = vcmask 1043456
    %v94 = vrot.slane %v34, 4
    %v95 = vrot.slane %v35, 4
    %v96 = vsel %vm93, %v94, %v95
    %v97 = vrot.slane %v36, 4
    %v98 = vsel %vm93, %v95, %v97
    %v99 = vrot.slane %v37, 4
    %v100 = vsel %vm93, %v97, %v99
    %101 = vrot.lane.b32.xlu0 %v96, 112
    %v102 = vpop.permute.xlu0 %101
    %103 = vrot.lane.b32.xlu0 %v98, 112
    %v104 = vpop.permute.xlu0 %103
    %105 = vrot.lane.b32.xlu0 %v100, 112
    %v106 = vpop.permute.xlu0 %105
    %vm110 = vcmask 228352
    %v111 = vsel %vm110, %v34, %v51
    %v112 = vsel %vm110, %v35, %v53
    %v113 = vsel %vm110, %v36, %v55
    %vm114 = vcmask 457728
    %v115 = vsel %vm114, %v111, %v68
    %v116 = vsel %vm114, %v112, %v70
    %v117 = vsel %vm114, %v113, %v72
    %vm118 = vcmask 687104
    %v119 = vsel %vm118, %v115, %v85
    %v120 = vsel %vm118, %v116, %v87
    %v121 = vsel %vm118, %v117, %v89
    %vm122 = vcmask 916480
    %v123 = vsel %vm122, %v119, %v102
    %v124 = vsel %vm122, %v120, %v104
    %v125 = vsel %vm122, %v121, %v106
    %s126 = scalar_lea.vmem %s0, 32
    %v127 = vld [vmem:[%s126] sm:$0xff]
    %v128 = vld [vmem:[%s126 + $0x8] sm:$0xff]
    %v129 = vld [vmem:[%s126 + $0x10] sm:$0xff]
    %v130 = vld [vmem:[%s126 + $0x18] sm:$0xf]
    %v135 = vrot.slane %v127, 1
    %v136 = vrot.slane %v128, 1
    %v137 = vsel %vm42, %v135, %v136
    %v138 = vrot.slane %v129, 1
    %v139 = vsel %vm42, %v136, %v138
    %v140 = vrot.slane %v130, 1
    %v141 = vsel %vm42, %v138, %v140
    %142 = vrot.lane.b32.xlu0 %v137, 28
    %v143 = vpop.permute.xlu0 %142
    %144 = vrot.lane.b32.xlu0 %v139, 28
    %v145 = vpop.permute.xlu0 %144
    %146 = vrot.lane.b32.xlu0 %v141, 28
    %v147 = vpop.permute.xlu0 %146
    %v151 = vrot.slane %v127, 2
    %v152 = vrot.slane %v128, 2
    %v153 = vsel %vm59, %v151, %v152
    %v154 = vrot.slane %v129, 2
    %v155 = vsel %vm59, %v152, %v154
    %v156 = vrot.slane %v130, 2
    %v157 = vsel %vm59, %v154, %v156
    %158 = vrot.lane.b32.xlu0 %v153, 56
    %v159 = vpop.permute.xlu0 %158
    %160 = vrot.lane.b32.xlu0 %v155, 56
    %v161 = vpop.permute.xlu0 %160
    %162 = vrot.lane.b32.xlu0 %v157, 56
    %v163 = vpop.permute.xlu0 %162
    %v167 = vrot.slane %v127, 3
    %v168 = vrot.slane %v128, 3
    %v169 = vsel %vm76, %v167, %v168
    %v170 = vrot.slane %v129, 3
    %v171 = vsel %vm76, %v168, %v170
    %v172 = vrot.slane %v130, 3
    %v173 = vsel %vm76, %v170, %v172
    %174 = vrot.lane.b32.xlu0 %v169, 84
    %v175 = vpop.permute.xlu0 %174
    %176 = vrot.lane.b32.xlu0 %v171, 84
    %v177 = vpop.permute.xlu0 %176
    %178 = vrot.lane.b32.xlu0 %v173, 84
    %v179 = vpop.permute.xlu0 %178
    %v183 = vrot.slane %v127, 4
    %v184 = vrot.slane %v128, 4
    %v185 = vsel %vm93, %v183, %v184
    %v186 = vrot.slane %v129, 4
    %v187 = vsel %vm93, %v184, %v186
    %v188 = vrot.slane %v130, 4
    %v189 = vsel %vm93, %v186, %v188
    %190 = vrot.lane.b32.xlu0 %v185, 112
    %v191 = vpop.permute.xlu0 %190
    %192 = vrot.lane.b32.xlu0 %v187, 112
    %v193 = vpop.permute.xlu0 %192
    %194 = vrot.lane.b32.xlu0 %v189, 112
    %v195 = vpop.permute.xlu0 %194
    %v199 = vsel %vm110, %v127, %v143
    %v200 = vsel %vm110, %v128, %v145
    %v201 = vsel %vm110, %v129, %v147
    %v202 = vsel %vm114, %v199, %v159
    %v203 = vsel %vm114, %v200, %v161
    %v204 = vsel %vm114, %v201, %v163
    %v205 = vsel %vm118, %v202, %v175
    %v206 = vsel %vm118, %v203, %v177
    %v207 = vsel %vm118, %v204, %v179
    %v208 = vsel %vm122, %v205, %v191
    %v209 = vsel %vm122, %v206, %v193
    %v210 = vsel %vm122, %v207, %v195
    %v211 = vpack.c.bf16 %v124, %v123
    %v212 = vpack.c.bf16 %v104, %v102
    %v213 = vpack.c.bf16 %v208, %v125
    %v214 = vpack.c.bf16 %v191, %v106
    %v215 = vpack.c.bf16 %v210, %v209
    %v216 = vpack.c.bf16 %v195, %v193
    %v217 = vld [vmem:[%s1] sm:$0xff]
    %v218 = vld [vmem:[%s1 + $0x8] sm:$0xff]
    %v219 = vld [vmem:[%s1 + $0x10] sm:$0xff]
    %v220 = vld [vmem:[%s1 + $0x18] sm:$0xff]
    %v221 = vld [vmem:[%s1 + $0x20] sm:$0xff]
    %v222 = vld [vmem:[%s1 + $0x28] sm:$0xff]
    %v223 = vld [vmem:[%s1 + $0x30] sm:$0xff]
    %v224 = vld [vmem:[%s1 + $0x38] sm:$0xff]
    %v225 = vld [vmem:[%s1 + $0x40] sm:$0xff]
    %v226 = vld [vmem:[%s1 + $0x48] sm:$0xff]
    %v227 = vld [vmem:[%s1 + $0x50] sm:$0xff]
    %v228 = vld [vmem:[%s1 + $0x58] sm:$0xff]
    %v229 = vld [vmem:[%s1 + $0x60] sm:$0xff]
    %v230 = vld [vmem:[%s1 + $0x68] sm:$0xff]
    %v231 = vld [vmem:[%s1 + $0x70] sm:$0xff]
    %v232 = vld [vmem:[%s1 + $0x78] sm:$0xff]
    %v233 = vld [vmem:[%s1 + $0x80] sm:$0xff]
    %v234 = vld [vmem:[%s1 + $0x88] sm:$0x33]
    %v235 = vld [vmem:[%s2] sm:$0x3]
    %v237 = vlaneseq
    %v238 = vshrl.u32 %v237, 7
    %v239 = vsub.s32 0, %v238
    %v240 = vrot.slane %v235, %v239
    %v241 = vlaneseq
    %v242 = vshrl.u32 %v241, 7
    %v243 = vsub.s32 1, %v242
    %v244 = vrot.slane %v235, %v243
    %v265 = vunpack.c.l.b16 %v217
    %v266 = vunpack.c.h.b16 %v217
    %v267 = vunpack.c.l.b16 %v218
    %v268 = vunpack.c.h.b16 %v218
    %v269 = vunpack.c.l.b16 %v219
    %v270 = vunpack.c.h.b16 %v219
    %v271 = vunpack.c.l.b16 %v220
    %v272 = vunpack.c.h.b16 %v220
    %v273 = vunpack.c.l.b16 %v221
    %v274 = vunpack.c.h.b16 %v221
    %v275 = vunpack.c.l.b16 %v222
    %v276 = vunpack.c.h.b16 %v222
    %v277 = vunpack.c.l.b16 %v223
    %v278 = vunpack.c.h.b16 %v223
    %v279 = vunpack.c.l.b16 %v224
    %v280 = vunpack.c.h.b16 %v224
    %v281 = vunpack.c.l.b16 %v225
    %v282 = vunpack.c.h.b16 %v225
    %v283 = vunpack.c.l.b16 %v226
    %v284 = vunpack.c.h.b16 %v226
    %v285 = vunpack.c.l.b16 %v227
    %v286 = vunpack.c.h.b16 %v227
    %v287 = vunpack.c.l.b16 %v228
    %v288 = vunpack.c.h.b16 %v228
    %v289 = vunpack.c.l.b16 %v229
    %v290 = vunpack.c.h.b16 %v229
    %v291 = vunpack.c.l.b16 %v230
    %v292 = vunpack.c.h.b16 %v230
    %v293 = vunpack.c.l.b16 %v231
    %v294 = vunpack.c.h.b16 %v231
    %v295 = vunpack.c.l.b16 %v232
    %v296 = vunpack.c.h.b16 %v232
    %v297 = vunpack.c.l.b16 %v233
    %v298 = vunpack.c.h.b16 %v233
    %v299 = vunpack.c.l.b16 %v234
    %v300 = vunpack.c.h.b16 %v234
    %v301 = vpack.c.b16 %v267, %v265
    %v302 = vpack.c.b16 %v268, %v266
    %v303 = vpack.c.b16 %v271, %v269
    %v304 = vpack.c.b16 %v272, %v270
    %v305 = vpack.c.b16 %v275, %v273
    %v306 = vpack.c.b16 %v276, %v274
    %v307 = vpack.c.b16 %v279, %v277
    %v308 = vpack.c.b16 %v280, %v278
    %v309 = vpack.c.b16 %v283, %v281
    %v310 = vpack.c.b16 %v284, %v282
    %v311 = vpack.c.b16 %v287, %v285
    %v312 = vpack.c.b16 %v288, %v286
    %v313 = vpack.c.b16 %v291, %v289
    %v314 = vpack.c.b16 %v292, %v290
    %v315 = vpack.c.b16 %v295, %v293
    %v316 = vpack.c.b16 %v296, %v294
    %v317 = vpack.c.b16 %v299, %v297
    %v318 = vpack.c.b16 %v300, %v298
    %vm335 = vcmask 97280
    %v337 = vsel %vm335, %v212, 0
    %v340 = vsel %vm335, %v214, 0
    %v343 = vsel %vm335, %v216, 0
    %v346 = vsel %vm59, %v317, 0
    %v349 = vsel %vm59, %v318, 0
    %351 = vmatprep.subr.bf16.mxu0 %v316
    %352 = vmatpush1.bf16.msra.mxu0 %v315
    %353 = vmatprep.subr.bf16.mxu0 %v314
    %354 = vmatpush1.bf16.msra.mxu0 %v313
    %355 = vmatprep.subr.bf16.mxu0 %v312
    %356 = vmatpush1.bf16.msra.mxu0 %v311
    %357 = vmatprep.subr.bf16.mxu0 %v310
    %358 = vmatpush1.bf16.msra.mxu0 %v309
    %359 = vmatprep.subr.bf16.mxu0 %v308
    %360 = vmatpush1.bf16.msra.mxu0 %v307
    %361 = vmatprep.subr.bf16.mxu0 %v306
    %362 = vmatpush1.bf16.msra.mxu0 %v305
    %363 = vmatprep.subr.bf16.mxu0 %v304
    %364 = vmatpush1.bf16.msra.mxu0 %v303
    %365 = vmatprep.subr.bf16.mxu0 %v302
    %366 = vmatpush1.bf16.msra.mxu0 %v301
    %367 = vmatprep.subr.bf16.mxu0 0
    %368 = vmatpush2.bf16.msra.mxu0 0
    %369 = vmatprep.subr.bf16.mxu0 0
    %370 = vmatpush2.bf16.msra.mxu0 0
    %371 = vmatprep.subr.bf16.mxu0 0
    %372 = vmatpush2.bf16.msra.mxu0 0
    %373 = vmatprep.subr.bf16.mxu0 0
    %374 = vmatpush2.bf16.msra.mxu0 0
    %375 = vmatprep.subr.bf16.mxu0 0
    %376 = vmatpush2.bf16.msra.mxu0 0
    %377 = vmatprep.subr.bf16.mxu0 0
    %378 = vmatpush2.bf16.msra.mxu0 0
    %379 = vmatprep.subr.bf16.mxu0 0
    %380 = vmatpush2.bf16.msra.mxu0 0
    %381 = vmatprep.subr.bf16.mxu0 %v349
    %382 = vmatpush2.bf16.msra.mxu0 %v346
    %383 = vmatprep.mubr.bf16.mxu0 %v337
    %384 = vmatmul.mubr.bf16.gmra.mxu0 %v211
    %v385 = vpop.f32.mrf.mxu0
    %v386 = vadd.f32 %v240, %v385
    %v387 = vpop.f32.mrf.mxu0
    %v388 = vadd.f32 %v244, %v387
    %v389 = vpop.f32.mrf.mxu0
    %v390 = vadd.f32 %v240, %v389
    %v391 = vpop.f32.mrf.mxu0
    %v392 = vadd.f32 %v244, %v391
    %393 = vmatprep.mubr.bf16.mxu0 %v340
    %394 = vmatmul.mubr.bf16.gmra.mxu0 %v213
    %v395 = vpop.f32.mrf.mxu0
    %v396 = vadd.f32 %v240, %v395
    %v397 = vpop.f32.mrf.mxu0
    %v398 = vadd.f32 %v244, %v397
    %v399 = vpop.f32.mrf.mxu0
    %v400 = vadd.f32 %v240, %v399
    %v401 = vpop.f32.mrf.mxu0
    %v402 = vadd.f32 %v244, %v401
    %403 = vmatprep.mubr.bf16.mxu0 %v343
    %404 = vmatmul.mubr.bf16.gmra.mxu0 %v215
    %v405 = vpop.f32.mrf.mxu0
    %v406 = vadd.f32 %v240, %v405
    %v407 = vpop.f32.mrf.mxu0
    %v408 = vadd.f32 %v244, %v407
    %v409 = vpop.f32.mrf.mxu0
    %v410 = vadd.f32 %v240, %v409
    %v411 = vpop.f32.mrf.mxu0
    %v412 = vadd.f32 %v244, %v411
    %413 = vdwg.mxu0
    %v416 = vrot.slane %v386, 1
    %v417 = vrot.slane %v388, 1
    %v420 = vmax.f32 %v386, %v416
    %v421 = vmax.f32 %v388, %v417
    %v424 = vrot.slane %v390, 1
    %v425 = vrot.slane %v392, 1
    %v428 = vmax.f32 %v390, %v424
    %v429 = vmax.f32 %v392, %v425
    %v432 = vrot.slane %v396, 1
    %v433 = vrot.slane %v398, 1
    %v436 = vmax.f32 %v396, %v432
    %v437 = vmax.f32 %v398, %v433
    %v440 = vrot.slane %v420, 1
    %v441 = vrot.slane %v421, 1
    %v444 = vrot.slane %v420, 2
    %v445 = vrot.slane %v421, 2
    %v448 = vrot.slane %v420, 3
    %v449 = vrot.slane %v421, 3
    %v454 = vrot.slane %v428, 4
    %v455 = vrot.slane %v429, 4
    %v458 = vrot.slane %v428, 5
    %v459 = vrot.slane %v429, 5
    %v462 = vrot.slane %v428, 6
    %v463 = vrot.slane %v429, 6
    %v466 = vrot.slane %v428, 7
    %v467 = vrot.slane %v429, 7
    %v472 = vrot.slane %v436, 1
    %v473 = vrot.slane %v437, 1
    %v476 = vrot.slane %v436, 2
    %v477 = vrot.slane %v437, 2
    %v480 = vrot.slane %v436, 3
    %v481 = vrot.slane %v437, 3
    %vm484 = vcmask 1040384
    %v485 = vsel %vm484, %v420, %v440
    %v486 = vsel %vm484, %v421, %v441
    %vm487 = vcmask 1041408
    %v488 = vsel %vm487, %v485, %v444
    %v489 = vsel %vm487, %v486, %v445
    %vm490 = vcmask 1042432
    %v491 = vsel %vm490, %v488, %v448
    %v492 = vsel %vm490, %v489, %v449
    %v493 = vsel %vm93, %v491, %v454
    %v494 = vsel %vm93, %v492, %v455
    %v495 = vsel %vm76, %v493, %v458
    %v496 = vsel %vm76, %v494, %v459
    %v497 = vsel %vm59, %v495, %v462
    %v498 = vsel %vm59, %v496, %v463
    %v499 = vsel %vm42, %v497, %v466
    %v500 = vsel %vm42, %v498, %v467
    %v501 = vsel %vm484, %v436, %v472
    %v502 = vsel %vm484, %v437, %v473
    %v503 = vsel %vm487, %v501, %v476
    %v504 = vsel %vm487, %v502, %v477
    %v505 = vsel %vm490, %v503, %v480
    %v506 = vsel %vm490, %v504, %v481
    %509 = vrot.lane.b32.xlu0 %v499, 118
    %v510 = vpop.permute.xlu0 %509
    %511 = vrot.lane.b32.xlu0 %v505, 118
    %v512 = vpop.permute.xlu0 %511
    %v515 = vmax.f32 %v499, %v510
    %v516 = vmax.f32 %v505, %v512
    %519 = vrot.lane.b32.xlu0 %v500, 118
    %v520 = vpop.permute.xlu0 %519
    %521 = vrot.lane.b32.xlu0 %v506, 118
    %v522 = vpop.permute.xlu0 %521
    %v525 = vmax.f32 %v499, %v520
    %v526 = vmax.f32 %v500, %v520
    %v527 = vmax.f32 %v505, %v522
    %v528 = vmax.f32 %v506, %v522
    %531 = vrot.lane.b32.xlu0 %v515, 118
    %v532 = vpop.permute.xlu0 %531
    %533 = vrot.lane.b32.xlu0 %v516, 118
    %v534 = vpop.permute.xlu0 %533
    %537 = vrot.lane.b32.xlu0 %v515, 108
    %v538 = vpop.permute.xlu0 %537
    %539 = vrot.lane.b32.xlu0 %v516, 108
    %v540 = vpop.permute.xlu0 %539
    %543 = vrot.lane.b32.xlu0 %v515, 98
    %v544 = vpop.permute.xlu0 %543
    %545 = vrot.lane.b32.xlu0 %v516, 98
    %v546 = vpop.permute.xlu0 %545
    %549 = vrot.lane.b32.xlu0 %v515, 88
    %v550 = vpop.permute.xlu0 %549
    %551 = vrot.lane.b32.xlu0 %v516, 88
    %v552 = vpop.permute.xlu0 %551
    %555 = vrot.lane.b32.xlu0 %v515, 78
    %v556 = vpop.permute.xlu0 %555
    %557 = vrot.lane.b32.xlu0 %v516, 78
    %v558 = vpop.permute.xlu0 %557
    %565 = vrot.lane.b32.xlu0 %v525, 68
    %v566 = vpop.permute.xlu0 %565
    %567 = vrot.lane.b32.xlu0 %v526, 68
    %v568 = vpop.permute.xlu0 %567
    %569 = vrot.lane.b32.xlu0 %v527, 68
    %v570 = vpop.permute.xlu0 %569
    %571 = vrot.lane.b32.xlu0 %v528, 68
    %v572 = vpop.permute.xlu0 %571
    %vm573 = vcmask 556032
    %v574 = vsel %vm573, %v566, %v568
    %v575 = vsel %vm573, %v570, %v572
    %578 = vrot.lane.b32.xlu0 %v526, 58
    %v579 = vpop.permute.xlu0 %578
    %580 = vrot.lane.b32.xlu0 %v528, 58
    %v581 = vpop.permute.xlu0 %580
    %584 = vrot.lane.b32.xlu0 %v526, 48
    %v585 = vpop.permute.xlu0 %584
    %586 = vrot.lane.b32.xlu0 %v528, 48
    %v587 = vpop.permute.xlu0 %586
    %590 = vrot.lane.b32.xlu0 %v526, 38
    %v591 = vpop.permute.xlu0 %590
    %592 = vrot.lane.b32.xlu0 %v528, 38
    %v593 = vpop.permute.xlu0 %592
    %596 = vrot.lane.b32.xlu0 %v526, 28
    %v597 = vpop.permute.xlu0 %596
    %598 = vrot.lane.b32.xlu0 %v528, 28
    %v599 = vpop.permute.xlu0 %598
    %602 = vrot.lane.b32.xlu0 %v526, 18
    %v603 = vpop.permute.xlu0 %602
    %604 = vrot.lane.b32.xlu0 %v528, 18
    %v605 = vpop.permute.xlu0 %604
    %vm608 = vcmask 80896
    %v609 = vsel %vm608, %v515, %v532
    %v610 = vsel %vm608, %v516, %v534
    %vm611 = vcmask 162816
    %v612 = vsel %vm611, %v609, %v538
    %v613 = vsel %vm611, %v610, %v540
    %vm614 = vcmask 244736
    %v615 = vsel %vm614, %v612, %v544
    %v616 = vsel %vm614, %v613, %v546
    %vm617 = vcmask 326656
    %v618 = vsel %vm617, %v615, %v550
    %v619 = vsel %vm617, %v616, %v552
    %vm620 = vcmask 408576
    %v621 = vsel %vm620, %v618, %v556
    %v622 = vsel %vm620, %v619, %v558
    %vm623 = vcmask 490496
    %v624 = vsel %vm623, %v621, %v574
    %v625 = vsel %vm623, %v622, %v575
    %vm626 = vcmask 572416
    %v627 = vsel %vm626, %v624, %v579
    %v628 = vsel %vm626, %v625, %v581
    %vm629 = vcmask 654336
    %v630 = vsel %vm629, %v627, %v585
    %v631 = vsel %vm629, %v628, %v587
    %vm632 = vcmask 736256
    %v633 = vsel %vm632, %v630, %v591
    %v634 = vsel %vm632, %v631, %v593
    %vm635 = vcmask 818176
    %v636 = vsel %vm635, %v633, %v597
    %v637 = vsel %vm635, %v634, %v599
    %vm638 = vcmask 900096
    %v639 = vsel %vm638, %v636, %v603
    %v640 = vsel %vm638, %v637, %v605
    %v641 = vmax.f32 %v639, 0.0
    %v642 = vmax.f32 %v640, 0.0
    %v645 = vrot.slane %v641, 1
    %v646 = vrot.slane %v642, 1
    %v647 = vsel %vm42, %v645, %v646
    %648 = vrot.lane.b32.xlu0 %v647, 120
    %v649 = vpop.permute.xlu0 %648
    %v651 = vrot.slane %v641, 2
    %v652 = vrot.slane %v642, 2
    %v653 = vsel %vm59, %v651, %v652
    %654 = vrot.lane.b32.xlu0 %v653, 112
    %v655 = vpop.permute.xlu0 %654
    %v657 = vrot.slane %v641, 3
    %v658 = vrot.slane %v642, 3
    %v659 = vsel %vm76, %v657, %v658
    %660 = vrot.lane.b32.xlu0 %v659, 104
    %v661 = vpop.permute.xlu0 %660
    %v663 = vrot.slane %v641, 4
    %v664 = vrot.slane %v642, 4
    %v665 = vsel %vm93, %v663, %v664
    %666 = vrot.lane.b32.xlu0 %v665, 96
    %v667 = vpop.permute.xlu0 %666
    %vm669 = vcmask 982016
    %v670 = vsel %vm669, %v641, %v649
    %v671 = vsel %vm122, %v649, %v655
    %vm672 = vcmask 850944
    %v673 = vsel %vm672, %v655, %v661
    %vm674 = vcmask 785408
    %v675 = vsel %vm674, %v661, %v667
    %v678 = vrot.slane %v400, 1
    %v679 = vrot.slane %v402, 1
    %v682 = vmax.f32 %v400, %v678
    %v683 = vmax.f32 %v402, %v679
    %v686 = vrot.slane %v406, 1
    %v687 = vrot.slane %v408, 1
    %v690 = vmax.f32 %v406, %v686
    %v691 = vmax.f32 %v408, %v687
    %v694 = vrot.slane %v410, 1
    %v695 = vrot.slane %v412, 1
    %v698 = vmax.f32 %v410, %v694
    %v699 = vmax.f32 %v412, %v695
    %v702 = vrot.slane %v682, 1
    %v703 = vrot.slane %v683, 1
    %v706 = vrot.slane %v682, 2
    %v707 = vrot.slane %v683, 2
    %v710 = vrot.slane %v682, 3
    %v711 = vrot.slane %v683, 3
    %v716 = vrot.slane %v690, 4
    %v717 = vrot.slane %v691, 4
    %v720 = vrot.slane %v690, 5
    %v721 = vrot.slane %v691, 5
    %v724 = vrot.slane %v690, 6
    %v725 = vrot.slane %v691, 6
    %v728 = vrot.slane %v690, 7
    %v729 = vrot.slane %v691, 7
    %v734 = vrot.slane %v698, 1
    %v735 = vrot.slane %v699, 1
    %v738 = vrot.slane %v698, 2
    %v739 = vrot.slane %v699, 2
    %v742 = vrot.slane %v698, 3
    %v743 = vrot.slane %v699, 3
    %v746 = vsel %vm484, %v682, %v702
    %v747 = vsel %vm484, %v683, %v703
    %v748 = vsel %vm487, %v746, %v706
    %v749 = vsel %vm487, %v747, %v707
    %v750 = vsel %vm490, %v748, %v710
    %v751 = vsel %vm490, %v749, %v711
    %v752 = vsel %vm93, %v750, %v716
    %v753 = vsel %vm93, %v751, %v717
    %v754 = vsel %vm76, %v752, %v720
    %v755 = vsel %vm76, %v753, %v721
    %v756 = vsel %vm59, %v754, %v724
    %v757 = vsel %vm59, %v755, %v725
    %v758 = vsel %vm42, %v756, %v728
    %v759 = vsel %vm42, %v757, %v729
    %v760 = vsel %vm484, %v698, %v734
    %v761 = vsel %vm484, %v699, %v735
    %v762 = vsel %vm487, %v760, %v738
    %v763 = vsel %vm487, %v761, %v739
    %v764 = vsel %vm490, %v762, %v742
    %v765 = vsel %vm490, %v763, %v743
    %768 = vrot.lane.b32.xlu0 %v758, 118
    %v769 = vpop.permute.xlu0 %768
    %770 = vrot.lane.b32.xlu0 %v764, 118
    %v771 = vpop.permute.xlu0 %770
    %v774 = vmax.f32 %v758, %v769
    %v775 = vmax.f32 %v764, %v771
    %778 = vrot.lane.b32.xlu0 %v759, 118
    %v779 = vpop.permute.xlu0 %778
    %780 = vrot.lane.b32.xlu0 %v765, 118
    %v781 = vpop.permute.xlu0 %780
    %v784 = vmax.f32 %v758, %v779
    %v785 = vmax.f32 %v759, %v779
    %v786 = vmax.f32 %v764, %v781
    %v787 = vmax.f32 %v765, %v781
    %790 = vrot.lane.b32.xlu0 %v774, 118
    %v791 = vpop.permute.xlu0 %790
    %792 = vrot.lane.b32.xlu0 %v775, 118
    %v793 = vpop.permute.xlu0 %792
    %796 = vrot.lane.b32.xlu0 %v774, 108
    %v797 = vpop.permute.xlu0 %796
    %798 = vrot.lane.b32.xlu0 %v775, 108
    %v799 = vpop.permute.xlu0 %798
    %802 = vrot.lane.b32.xlu0 %v774, 98
    %v803 = vpop.permute.xlu0 %802
    %804 = vrot.lane.b32.xlu0 %v775, 98
    %v805 = vpop.permute.xlu0 %804
    %808 = vrot.lane.b32.xlu0 %v774, 88
    %v809 = vpop.permute.xlu0 %808
    %810 = vrot.lane.b32.xlu0 %v775, 88
    %v811 = vpop.permute.xlu0 %810
    %814 = vrot.lane.b32.xlu0 %v774, 78
    %v815 = vpop.permute.xlu0 %814
    %816 = vrot.lane.b32.xlu0 %v775, 78
    %v817 = vpop.permute.xlu0 %816
    %824 = vrot.lane.b32.xlu0 %v784, 68
    %v825 = vpop.permute.xlu0 %824
    %826 = vrot.lane.b32.xlu0 %v785, 68
    %v827 = vpop.permute.xlu0 %826
    %828 = vrot.lane.b32.xlu0 %v786, 68
    %v829 = vpop.permute.xlu0 %828
    %830 = vrot.lane.b32.xlu0 %v787, 68
    %v831 = vpop.permute.xlu0 %830
    %v832 = vsel %vm573, %v825, %v827
    %v833 = vsel %vm573, %v829, %v831
    %836 = vrot.lane.b32.xlu0 %v785, 58
    %v837 = vpop.permute.xlu0 %836
    %838 = vrot.lane.b32.xlu0 %v787, 58
    %v839 = vpop.permute.xlu0 %838
    %842 = vrot.lane.b32.xlu0 %v785, 48
    %v843 = vpop.permute.xlu0 %842
    %844 = vrot.lane.b32.xlu0 %v787, 48
    %v845 = vpop.permute.xlu0 %844
    %848 = vrot.lane.b32.xlu0 %v785, 38
    %v849 = vpop.permute.xlu0 %848
    %850 = vrot.lane.b32.xlu0 %v787, 38
    %v851 = vpop.permute.xlu0 %850
    %854 = vrot.lane.b32.xlu0 %v785, 28
    %v855 = vpop.permute.xlu0 %854
    %856 = vrot.lane.b32.xlu0 %v787, 28
    %v857 = vpop.permute.xlu0 %856
    %860 = vrot.lane.b32.xlu0 %v785, 18
    %v861 = vpop.permute.xlu0 %860
    %862 = vrot.lane.b32.xlu0 %v787, 18
    %v863 = vpop.permute.xlu0 %862
    %v866 = vsel %vm608, %v774, %v791
    %v867 = vsel %vm608, %v775, %v793
    %v868 = vsel %vm611, %v866, %v797
    %v869 = vsel %vm611, %v867, %v799
    %v870 = vsel %vm614, %v868, %v803
    %v871 = vsel %vm614, %v869, %v805
    %v872 = vsel %vm617, %v870, %v809
    %v873 = vsel %vm617, %v871, %v811
    %v874 = vsel %vm620, %v872, %v815
    %v875 = vsel %vm620, %v873, %v817
    %v876 = vsel %vm623, %v874, %v832
    %v877 = vsel %vm623, %v875, %v833
    %v878 = vsel %vm626, %v876, %v837
    %v879 = vsel %vm626, %v877, %v839
    %v880 = vsel %vm629, %v878, %v843
    %v881 = vsel %vm629, %v879, %v845
    %v882 = vsel %vm632, %v880, %v849
    %v883 = vsel %vm632, %v881, %v851
    %v884 = vsel %vm635, %v882, %v855
    %v885 = vsel %vm635, %v883, %v857
    %v886 = vsel %vm638, %v884, %v861
    %v887 = vsel %vm638, %v885, %v863
    %v888 = vmax.f32 %v886, 0.0
    %v889 = vmax.f32 %v887, 0.0
    %v892 = vrot.slane %v888, 1
    %v893 = vrot.slane %v889, 1
    %v894 = vsel %vm42, %v892, %v893
    %895 = vrot.lane.b32.xlu0 %v894, 120
    %v896 = vpop.permute.xlu0 %895
    %v898 = vrot.slane %v888, 2
    %v899 = vrot.slane %v889, 2
    %v900 = vsel %vm59, %v898, %v899
    %901 = vrot.lane.b32.xlu0 %v900, 112
    %v902 = vpop.permute.xlu0 %901
    %v904 = vrot.slane %v888, 3
    %v905 = vrot.slane %v889, 3
    %v906 = vsel %vm76, %v904, %v905
    %907 = vrot.lane.b32.xlu0 %v906, 104
    %v908 = vpop.permute.xlu0 %907
    %v910 = vrot.slane %v888, 4
    %v911 = vrot.slane %v889, 4
    %v912 = vsel %vm93, %v910, %v911
    %913 = vrot.lane.b32.xlu0 %v912, 96
    %v914 = vpop.permute.xlu0 %913
    %v916 = vsel %vm669, %v888, %v896
    %v917 = vsel %vm122, %v896, %v902
    %v918 = vsel %vm672, %v902, %v908
    %v919 = vsel %vm674, %v908, %v914
    %v920 = vpack.c.bf16 %v916, %v670
    %v921 = vpack.c.bf16 %v917, %v671
    %v922 = vpack.c.bf16 %v918, %v673
    %v923 = vpack.c.bf16 %v919, %v675
    %v924 = vpack.c.bf16 %v914, %v667
    %v925 = vld [vmem:[%s3] sm:$0xff]
    %v926 = vld [vmem:[%s3 + $0x8] sm:$0xff]
    %v927 = vld [vmem:[%s3 + $0x10] sm:$0xff]
    %v928 = vld [vmem:[%s3 + $0x18] sm:$0xff]
    %v929 = vld [vmem:[%s3 + $0x20] sm:$0xff]
    %v930 = vld [vmem:[%s3 + $0x28] sm:$0xff]
    %v931 = vld [vmem:[%s3 + $0x30] sm:$0xff]
    %v932 = vld [vmem:[%s3 + $0x38] sm:$0xff]
    %v933 = vld [vmem:[%s3 + $0x40] sm:$0xff]
    %v934 = vld [vmem:[%s3 + $0x48] sm:$0xff]
    %v935 = vld [vmem:[%s3 + $0x50] sm:$0xff]
    %v936 = vld [vmem:[%s3 + $0x58] sm:$0xff]
    %v937 = vld [vmem:[%s3 + $0x60] sm:$0xff]
    %v938 = vld [vmem:[%s3 + $0x68] sm:$0xff]
    %v939 = vld [vmem:[%s3 + $0x70] sm:$0xff]
    %v940 = vld [vmem:[%s3 + $0x78] sm:$0xff]
    %v941 = vld [vmem:[%s3 + $0x80] sm:$0xff]
    %v942 = vld [vmem:[%s3 + $0x88] sm:$0xff]
    %v943 = vld [vmem:[%s3 + $0x90] sm:$0xff]
    %v944 = vld [vmem:[%s3 + $0x98] sm:$0xff]
    %v945 = vld [vmem:[%s3 + $0xa0] sm:$0xff]
    %v946 = vld [vmem:[%s3 + $0xa8] sm:$0xff]
    %v947 = vld [vmem:[%s3 + $0xb0] sm:$0xff]
    %v948 = vld [vmem:[%s3 + $0xb8] sm:$0xff]
    %v949 = vld [vmem:[%s3 + $0xc0] sm:$0xff]
    %v950 = vld [vmem:[%s3 + $0xc8] sm:$0xff]
    %v951 = vld [vmem:[%s3 + $0xd0] sm:$0xff]
    %v952 = vld [vmem:[%s3 + $0xd8] sm:$0xff]
    %v953 = vld [vmem:[%s3 + $0xe0] sm:$0xff]
    %v954 = vld [vmem:[%s3 + $0xe8] sm:$0xff]
    %v955 = vld [vmem:[%s3 + $0xf0] sm:$0xff]
    %v956 = vld [vmem:[%s3 + $0xf8] sm:$0xff]
    %v957 = vld [vmem:[%s3 + $0x100] sm:$0xff]
    %v958 = vld [vmem:[%s3 + $0x108] sm:$0xff]
    %v959 = vld [vmem:[%s3 + $0x110] sm:$0xff]
    %v960 = vld [vmem:[%s3 + $0x118] sm:$0xff]
    %v961 = vld [vmem:[%s3 + $0x120] sm:$0xff]
    %v962 = vld [vmem:[%s3 + $0x128] sm:$0xff]
    %v963 = vld [vmem:[%s3 + $0x130] sm:$0xff]
    %v964 = vld [vmem:[%s3 + $0x138] sm:$0xff]
    %v965 = vld [vmem:[%s3 + $0x140] sm:$0xff]
    %v966 = vld [vmem:[%s3 + $0x148] sm:$0xff]
    %v967 = vld [vmem:[%s3 + $0x150] sm:$0xff]
    %v968 = vld [vmem:[%s3 + $0x158] sm:$0xff]
    %v969 = vld [vmem:[%s3 + $0x160] sm:$0xff]
    %v970 = vld [vmem:[%s3 + $0x168] sm:$0xff]
    %v971 = vld [vmem:[%s3 + $0x170] sm:$0xff]
    %v972 = vld [vmem:[%s3 + $0x178] sm:$0xff]
    %v973 = vld [vmem:[%s3 + $0x180] sm:$0xff]
    %v974 = vld [vmem:[%s3 + $0x188] sm:$0xff]
    %v975 = vld [vmem:[%s3 + $0x190] sm:$0xff]
    %v976 = vld [vmem:[%s3 + $0x198] sm:$0xff]
    %v977 = vld [vmem:[%s3 + $0x1a0] sm:$0xff]
    %v978 = vld [vmem:[%s3 + $0x1a8] sm:$0xff]
    %v979 = vld [vmem:[%s3 + $0x1b0] sm:$0xff]
    %v980 = vld [vmem:[%s3 + $0x1b8] sm:$0xff]
    %v981 = vld [vmem:[%s3 + $0x1c0] sm:$0xff]
    %v982 = vld [vmem:[%s3 + $0x1c8] sm:$0xff]
    %v983 = vld [vmem:[%s3 + $0x1d0] sm:$0xff]
    %v984 = vld [vmem:[%s3 + $0x1d8] sm:$0xff]
    %v985 = vld [vmem:[%s3 + $0x1e0] sm:$0xff]
    %v986 = vld [vmem:[%s3 + $0x1e8] sm:$0xff]
    %v987 = vld [vmem:[%s3 + $0x1f0] sm:$0xff]
    %v988 = vld [vmem:[%s3 + $0x1f8] sm:$0xff]
    %v989 = vld [vmem:[%s3 + $0x200] sm:$0xff]
    %v990 = vld [vmem:[%s3 + $0x208] sm:$0xff]
    %v991 = vld [vmem:[%s3 + $0x210] sm:$0xff]
    %v992 = vld [vmem:[%s3 + $0x218] sm:$0xff]
    %v993 = vld [vmem:[%s3 + $0x220] sm:$0xff]
    %v994 = vld [vmem:[%s3 + $0x228] sm:$0xff]
    %v995 = vld [vmem:[%s3 + $0x230] sm:$0xff]
    %v996 = vld [vmem:[%s3 + $0x238] sm:$0xff]
    %v997 = vld [vmem:[%s3 + $0x240] sm:$0xff]
    %v998 = vld [vmem:[%s3 + $0x248] sm:$0xff]
    %v999 = vld [vmem:[%s3 + $0x250] sm:$0xff]
    %v1000 = vld [vmem:[%s4] sm:$0x3]
    %v1002 = vlaneseq
    %v1003 = vshrl.u32 %v1002, 7
    %v1004 = vsub.s32 0, %v1003
    %v1005 = vrot.slane %v1000, %v1004
    %v1006 = vlaneseq
    %v1007 = vshrl.u32 %v1006, 7
    %v1008 = vsub.s32 1, %v1007
    %v1009 = vrot.slane %v1000, %v1008
    %v1087 = vunpack.c.l.b16 %v925
    %v1088 = vunpack.c.h.b16 %v925
    %v1089 = vunpack.c.l.b16 %v926
    %v1090 = vunpack.c.h.b16 %v926
    %v1091 = vunpack.c.l.b16 %v927
    %v1092 = vunpack.c.h.b16 %v927
    %v1093 = vunpack.c.l.b16 %v928
    %v1094 = vunpack.c.h.b16 %v928
    %v1095 = vunpack.c.l.b16 %v929
    %v1096 = vunpack.c.h.b16 %v929
    %v1097 = vunpack.c.l.b16 %v930
    %v1098 = vunpack.c.h.b16 %v930
    %v1099 = vunpack.c.l.b16 %v931
    %v1100 = vunpack.c.h.b16 %v931
    %v1101 = vunpack.c.l.b16 %v932
    %v1102 = vunpack.c.h.b16 %v932
    %v1103 = vunpack.c.l.b16 %v933
    %v1104 = vunpack.c.h.b16 %v933
    %v1105 = vunpack.c.l.b16 %v934
    %v1106 = vunpack.c.h.b16 %v934
    %v1107 = vunpack.c.l.b16 %v935
    %v1108 = vunpack.c.h.b16 %v935
    %v1109 = vunpack.c.l.b16 %v936
    %v1110 = vunpack.c.h.b16 %v936
    %v1111 = vunpack.c.l.b16 %v937
    %v1112 = vunpack.c.h.b16 %v937
    %v1113 = vunpack.c.l.b16 %v938
    %v1114 = vunpack.c.h.b16 %v938
    %v1115 = vunpack.c.l.b16 %v939
    %v1116 = vunpack.c.h.b16 %v939
    %v1117 = vunpack.c.l.b16 %v940
    %v1118 = vunpack.c.h.b16 %v940
    %v1119 = vunpack.c.l.b16 %v941
    %v1120 = vunpack.c.h.b16 %v941
    %v1121 = vunpack.c.l.b16 %v942
    %v1122 = vunpack.c.h.b16 %v942
    %v1123 = vunpack.c.l.b16 %v943
    %v1124 = vunpack.c.h.b16 %v943
    %v1125 = vunpack.c.l.b16 %v944
    %v1126 = vunpack.c.h.b16 %v944
    %v1127 = vunpack.c.l.b16 %v945
    %v1128 = vunpack.c.h.b16 %v945
    %v1129 = vunpack.c.l.b16 %v946
    %v1130 = vunpack.c.h.b16 %v946
    %v1131 = vunpack.c.l.b16 %v947
    %v1132 = vunpack.c.h.b16 %v947
    %v1133 = vunpack.c.l.b16 %v948
    %v1134 = vunpack.c.h.b16 %v948
    %v1135 = vunpack.c.l.b16 %v949
    %v1136 = vunpack.c.h.b16 %v949
    %v1137 = vunpack.c.l.b16 %v950
    %v1138 = vunpack.c.h.b16 %v950
    %v1139 = vunpack.c.l.b16 %v951
    %v1140 = vunpack.c.h.b16 %v951
    %v1141 = vunpack.c.l.b16 %v952
    %v1142 = vunpack.c.h.b16 %v952
    %v1143 = vunpack.c.l.b16 %v953
    %v1144 = vunpack.c.h.b16 %v953
    %v1145 = vunpack.c.l.b16 %v954
    %v1146 = vunpack.c.h.b16 %v954
    %v1147 = vunpack.c.l.b16 %v955
    %v1148 = vunpack.c.h.b16 %v955
    %v1149 = vunpack.c.l.b16 %v956
    %v1150 = vunpack.c.h.b16 %v956
    %v1151 = vunpack.c.l.b16 %v957
    %v1152 = vunpack.c.h.b16 %v957
    %v1153 = vunpack.c.l.b16 %v958
    %v1154 = vunpack.c.h.b16 %v958
    %v1155 = vunpack.c.l.b16 %v959
    %v1156 = vunpack.c.h.b16 %v959
    %v1157 = vunpack.c.l.b16 %v960
    %v1158 = vunpack.c.h.b16 %v960
    %v1159 = vunpack.c.l.b16 %v961
    %v1160 = vunpack.c.h.b16 %v961
    %v1161 = vunpack.c.l.b16 %v962
    %v1162 = vunpack.c.h.b16 %v962
    %v1163 = vunpack.c.l.b16 %v963
    %v1164 = vunpack.c.h.b16 %v963
    %v1165 = vunpack.c.l.b16 %v964
    %v1166 = vunpack.c.h.b16 %v964
    %v1167 = vunpack.c.l.b16 %v965
    %v1168 = vunpack.c.h.b16 %v965
    %v1169 = vunpack.c.l.b16 %v966
    %v1170 = vunpack.c.h.b16 %v966
    %v1171 = vunpack.c.l.b16 %v967
    %v1172 = vunpack.c.h.b16 %v967
    %v1173 = vunpack.c.l.b16 %v968
    %v1174 = vunpack.c.h.b16 %v968
    %v1175 = vunpack.c.l.b16 %v969
    %v1176 = vunpack.c.h.b16 %v969
    %v1177 = vunpack.c.l.b16 %v970
    %v1178 = vunpack.c.h.b16 %v970
    %v1179 = vunpack.c.l.b16 %v971
    %v1180 = vunpack.c.h.b16 %v971
    %v1181 = vunpack.c.l.b16 %v972
    %v1182 = vunpack.c.h.b16 %v972
    %v1183 = vunpack.c.l.b16 %v973
    %v1184 = vunpack.c.h.b16 %v973
    %v1185 = vunpack.c.l.b16 %v974
    %v1186 = vunpack.c.h.b16 %v974
    %v1187 = vunpack.c.l.b16 %v975
    %v1188 = vunpack.c.h.b16 %v975
    %v1189 = vunpack.c.l.b16 %v976
    %v1190 = vunpack.c.h.b16 %v976
    %v1191 = vunpack.c.l.b16 %v977
    %v1192 = vunpack.c.h.b16 %v977
    %v1193 = vunpack.c.l.b16 %v978
    %v1194 = vunpack.c.h.b16 %v978
    %v1195 = vunpack.c.l.b16 %v979
    %v1196 = vunpack.c.h.b16 %v979
    %v1197 = vunpack.c.l.b16 %v980
    %v1198 = vunpack.c.h.b16 %v980
    %v1199 = vunpack.c.l.b16 %v981
    %v1200 = vunpack.c.h.b16 %v981
    %v1201 = vunpack.c.l.b16 %v982
    %v1202 = vunpack.c.h.b16 %v982
    %v1203 = vunpack.c.l.b16 %v983
    %v1204 = vunpack.c.h.b16 %v983
    %v1205 = vunpack.c.l.b16 %v984
    %v1206 = vunpack.c.h.b16 %v984
    %v1207 = vunpack.c.l.b16 %v985
    %v1208 = vunpack.c.h.b16 %v985
    %v1209 = vunpack.c.l.b16 %v986
    %v1210 = vunpack.c.h.b16 %v986
    %v1211 = vunpack.c.l.b16 %v987
    %v1212 = vunpack.c.h.b16 %v987
    %v1213 = vunpack.c.l.b16 %v988
    %v1214 = vunpack.c.h.b16 %v988
    %v1215 = vunpack.c.l.b16 %v989
    %v1216 = vunpack.c.h.b16 %v989
    %v1217 = vunpack.c.l.b16 %v990
    %v1218 = vunpack.c.h.b16 %v990
    %v1219 = vunpack.c.l.b16 %v991
    %v1220 = vunpack.c.h.b16 %v991
    %v1221 = vunpack.c.l.b16 %v992
    %v1222 = vunpack.c.h.b16 %v992
    %v1223 = vunpack.c.l.b16 %v993
    %v1224 = vunpack.c.h.b16 %v993
    %v1225 = vunpack.c.l.b16 %v994
    %v1226 = vunpack.c.h.b16 %v994
    %v1227 = vunpack.c.l.b16 %v995
    %v1228 = vunpack.c.h.b16 %v995
    %v1229 = vunpack.c.l.b16 %v996
    %v1230 = vunpack.c.h.b16 %v996
    %v1231 = vunpack.c.l.b16 %v997
    %v1232 = vunpack.c.h.b16 %v997
    %v1233 = vunpack.c.l.b16 %v998
    %v1234 = vunpack.c.h.b16 %v998
    %v1235 = vunpack.c.l.b16 %v999
    %v1236 = vunpack.c.h.b16 %v999
    %v1237 = vpack.c.b16 %v1089, %v1087
    %v1238 = vpack.c.b16 %v1090, %v1088
    %v1239 = vpack.c.b16 %v1093, %v1091
    %v1240 = vpack.c.b16 %v1094, %v1092
    %v1241 = vpack.c.b16 %v1097, %v1095
    %v1242 = vpack.c.b16 %v1098, %v1096
    %v1243 = vpack.c.b16 %v1101, %v1099
    %v1244 = vpack.c.b16 %v1102, %v1100
    %v1245 = vpack.c.b16 %v1105, %v1103
    %v1246 = vpack.c.b16 %v1106, %v1104
    %v1247 = vpack.c.b16 %v1109, %v1107
    %v1248 = vpack.c.b16 %v1110, %v1108
    %v1249 = vpack.c.b16 %v1113, %v1111
    %v1250 = vpack.c.b16 %v1114, %v1112
    %v1251 = vpack.c.b16 %v1117, %v1115
    %v1252 = vpack.c.b16 %v1118, %v1116
    %v1253 = vpack.c.b16 %v1121, %v1119
    %v1254 = vpack.c.b16 %v1122, %v1120
    %v1255 = vpack.c.b16 %v1125, %v1123
    %v1256 = vpack.c.b16 %v1126, %v1124
    %v1257 = vpack.c.b16 %v1129, %v1127
    %v1258 = vpack.c.b16 %v1130, %v1128
    %v1259 = vpack.c.b16 %v1133, %v1131
    %v1260 = vpack.c.b16 %v1134, %v1132
    %v1261 = vpack.c.b16 %v1137, %v1135
    %v1262 = vpack.c.b16 %v1138, %v1136
    %v1263 = vpack.c.b16 %v1141, %v1139
    %v1264 = vpack.c.b16 %v1142, %v1140
    %v1265 = vpack.c.b16 %v1145, %v1143
    %v1266 = vpack.c.b16 %v1146, %v1144
    %v1267 = vpack.c.b16 %v1149, %v1147
    %v1268 = vpack.c.b16 %v1150, %v1148
    %v1269 = vpack.c.b16 %v1153, %v1151
    %v1270 = vpack.c.b16 %v1154, %v1152
    %v1271 = vpack.c.b16 %v1157, %v1155
    %v1272 = vpack.c.b16 %v1158, %v1156
    %v1273 = vpack.c.b16 %v1161, %v1159
    %v1274 = vpack.c.b16 %v1162, %v1160
    %v1275 = vpack.c.b16 %v1165, %v1163
    %v1276 = vpack.c.b16 %v1166, %v1164
    %v1277 = vpack.c.b16 %v1169, %v1167
    %v1278 = vpack.c.b16 %v1170, %v1168
    %v1279 = vpack.c.b16 %v1173, %v1171
    %v1280 = vpack.c.b16 %v1174, %v1172
    %v1281 = vpack.c.b16 %v1177, %v1175
    %v1282 = vpack.c.b16 %v1178, %v1176
    %v1283 = vpack.c.b16 %v1181, %v1179
    %v1284 = vpack.c.b16 %v1182, %v1180
    %v1285 = vpack.c.b16 %v1185, %v1183
    %v1286 = vpack.c.b16 %v1186, %v1184
    %v1287 = vpack.c.b16 %v1189, %v1187
    %v1288 = vpack.c.b16 %v1190, %v1188
    %v1289 = vpack.c.b16 %v1193, %v1191
    %v1290 = vpack.c.b16 %v1194, %v1192
    %v1291 = vpack.c.b16 %v1197, %v1195
    %v1292 = vpack.c.b16 %v1198, %v1196
    %v1293 = vpack.c.b16 %v1201, %v1199
    %v1294 = vpack.c.b16 %v1202, %v1200
    %v1295 = vpack.c.b16 %v1205, %v1203
    %v1296 = vpack.c.b16 %v1206, %v1204
    %v1297 = vpack.c.b16 %v1209, %v1207
    %v1298 = vpack.c.b16 %v1210, %v1208
    %v1299 = vpack.c.b16 %v1213, %v1211
    %v1300 = vpack.c.b16 %v1214, %v1212
    %v1301 = vpack.c.b16 %v1217, %v1215
    %v1302 = vpack.c.b16 %v1218, %v1216
    %v1303 = vpack.c.b16 %v1221, %v1219
    %v1304 = vpack.c.b16 %v1222, %v1220
    %v1305 = vpack.c.b16 %v1225, %v1223
    %v1306 = vpack.c.b16 %v1226, %v1224
    %v1307 = vpack.c.b16 %v1229, %v1227
    %v1308 = vpack.c.b16 %v1230, %v1228
    %v1309 = vpack.c.b16 %v1233, %v1231
    %v1310 = vpack.c.b16 %v1234, %v1232
    %v1311 = vpack.c.b16 %v1235, %v1235
    %v1312 = vpack.c.b16 %v1236, %v1236
    %vm1387 = vcmask 719872
    %v1389 = vsel %vm1387, %v924, 0
    %v1392 = vsel %vm93, %v1311, 0
    %v1395 = vsel %vm93, %v1312, 0
    %1397 = vmatprep.subr.bf16.mxu0 %v1252
    %1398 = vmatpush1.bf16.msra.mxu0 %v1251
    %1399 = vmatprep.subr.bf16.mxu0 %v1250
    %1400 = vmatpush1.bf16.msra.mxu0 %v1249
    %1401 = vmatprep.subr.bf16.mxu0 %v1248
    %1402 = vmatpush1.bf16.msra.mxu0 %v1247
    %1403 = vmatprep.subr.bf16.mxu0 %v1246
    %1404 = vmatpush1.bf16.msra.mxu0 %v1245
    %1405 = vmatprep.subr.bf16.mxu0 %v1244
    %1406 = vmatpush1.bf16.msra.mxu0 %v1243
    %1407 = vmatprep.subr.bf16.mxu0 %v1242
    %1408 = vmatpush1.bf16.msra.mxu0 %v1241
    %1409 = vmatprep.subr.bf16.mxu0 %v1240
    %1410 = vmatpush1.bf16.msra.mxu0 %v1239
    %1411 = vmatprep.subr.bf16.mxu0 %v1238
    %1412 = vmatpush1.bf16.msra.mxu0 %v1237
    %1413 = vmatprep.subr.bf16.mxu0 %v1268
    %1414 = vmatpush2.bf16.msra.mxu0 %v1267
    %1415 = vmatprep.subr.bf16.mxu0 %v1266
    %1416 = vmatpush2.bf16.msra.mxu0 %v1265
    %1417 = vmatprep.subr.bf16.mxu0 %v1264
    %1418 = vmatpush2.bf16.msra.mxu0 %v1263
    %1419 = vmatprep.subr.bf16.mxu0 %v1262
    %1420 = vmatpush2.bf16.msra.mxu0 %v1261
    %1421 = vmatprep.subr.bf16.mxu0 %v1260
    %1422 = vmatpush2.bf16.msra.mxu0 %v1259
    %1423 = vmatprep.subr.bf16.mxu0 %v1258
    %1424 = vmatpush2.bf16.msra.mxu0 %v1257
    %1425 = vmatprep.subr.bf16.mxu0 %v1256
    %1426 = vmatpush2.bf16.msra.mxu0 %v1255
    %1427 = vmatprep.subr.bf16.mxu0 %v1254
    %1428 = vmatpush2.bf16.msra.mxu0 %v1253
    %1429 = vmatprep.mubr.bf16.mxu0 %v921
    %1430 = vmatmul.mubr.bf16.gmra.mxu0 %v920
    %v1431 = vpop.f32.mrf.mxu0
    %v1432 = vadd.f32 %v1005, %v1431
    %v1433 = vpop.f32.mrf.mxu0
    %v1434 = vadd.f32 %v1009, %v1433
    %v1435 = vpop.f32.mrf.mxu0
    %v1436 = vadd.f32 %v1005, %v1435
    %v1437 = vpop.f32.mrf.mxu0
    %v1438 = vadd.f32 %v1009, %v1437
    %1439 = vdwg.mxu0
    %1440 = vmatprep.subr.bf16.mxu0 %v1284
    %1441 = vmatpush1.bf16.msra.mxu0 %v1283
    %1442 = vmatprep.subr.bf16.mxu0 %v1282
    %1443 = vmatpush1.bf16.msra.mxu0 %v1281
    %1444 = vmatprep.subr.bf16.mxu0 %v1280
    %1445 = vmatpush1.bf16.msra.mxu0 %v1279
    %1446 = vmatprep.subr.bf16.mxu0 %v1278
    %1447 = vmatpush1.bf16.msra.mxu0 %v1277
    %1448 = vmatprep.subr.bf16.mxu0 %v1276
    %1449 = vmatpush1.bf16.msra.mxu0 %v1275
    %1450 = vmatprep.subr.bf16.mxu0 %v1274
    %1451 = vmatpush1.bf16.msra.mxu0 %v1273
    %1452 = vmatprep.subr.bf16.mxu0 %v1272
    %1453 = vmatpush1.bf16.msra.mxu0 %v1271
    %1454 = vmatprep.subr.bf16.mxu0 %v1270
    %1455 = vmatpush1.bf16.msra.mxu0 %v1269
    %1456 = vmatprep.subr.bf16.mxu0 %v1300
    %1457 = vmatpush2.bf16.msra.mxu0 %v1299
    %1458 = vmatprep.subr.bf16.mxu0 %v1298
    %1459 = vmatpush2.bf16.msra.mxu0 %v1297
    %1460 = vmatprep.subr.bf16.mxu0 %v1296
    %1461 = vmatpush2.bf16.msra.mxu0 %v1295
    %1462 = vmatprep.subr.bf16.mxu0 %v1294
    %1463 = vmatpush2.bf16.msra.mxu0 %v1293
    %1464 = vmatprep.subr.bf16.mxu0 %v1292
    %1465 = vmatpush2.bf16.msra.mxu0 %v1291
    %1466 = vmatprep.subr.bf16.mxu0 %v1290
    %1467 = vmatpush2.bf16.msra.mxu0 %v1289
    %1468 = vmatprep.subr.bf16.mxu0 %v1288
    %1469 = vmatpush2.bf16.msra.mxu0 %v1287
    %1470 = vmatprep.subr.bf16.mxu0 %v1286
    %1471 = vmatpush2.bf16.msra.mxu0 %v1285
    %1472 = vmatprep.mubr.bf16.mxu0 %v923
    %1473 = vmatmul.mubr.bf16.gmra.mxu0 %v922
    %v1474 = vpop.f32.mrf.mxu0
    %v1475 = vadd.f32 %v1432, %v1474
    %v1476 = vpop.f32.mrf.mxu0
    %v1477 = vadd.f32 %v1434, %v1476
    %v1478 = vpop.f32.mrf.mxu0
    %v1479 = vadd.f32 %v1436, %v1478
    %v1480 = vpop.f32.mrf.mxu0
    %v1481 = vadd.f32 %v1438, %v1480
    %1482 = vdwg.mxu0
    %1483 = vmatprep.subr.bf16.mxu0 0
    %1484 = vmatpush1.bf16.msra.mxu0 0
    %1485 = vmatprep.subr.bf16.mxu0 0
    %1486 = vmatpush1.bf16.msra.mxu0 0
    %1487 = vmatprep.subr.bf16.mxu0 %v1395
    %1488 = vmatpush1.bf16.msra.mxu0 %v1392
    %1489 = vmatprep.subr.bf16.mxu0 %v1310
    %1490 = vmatpush1.bf16.msra.mxu0 %v1309
    %1491 = vmatprep.subr.bf16.mxu0 %v1308
    %1492 = vmatpush1.bf16.msra.mxu0 %v1307
    %1493 = vmatprep.subr.bf16.mxu0 %v1306
    %1494 = vmatpush1.bf16.msra.mxu0 %v1305
    %1495 = vmatprep.subr.bf16.mxu0 %v1304
    %1496 = vmatpush1.bf16.msra.mxu0 %v1303
    %1497 = vmatprep.subr.bf16.mxu0 %v1302
    %1498 = vmatpush1.bf16.msra.mxu0 %v1301
    %1499 = vmatprep.subr.bf16.mxu0 0
    %1500 = vmatpush2.bf16.msra.mxu0 0
    %1501 = vmatprep.subr.bf16.mxu0 0
    %1502 = vmatpush2.bf16.msra.mxu0 0
    %1503 = vmatprep.subr.bf16.mxu0 0
    %1504 = vmatpush2.bf16.msra.mxu0 0
    %1505 = vmatprep.subr.bf16.mxu0 0
    %1506 = vmatpush2.bf16.msra.mxu0 0
    %1507 = vmatprep.subr.bf16.mxu0 0
    %1508 = vmatpush2.bf16.msra.mxu0 0
    %1509 = vmatprep.subr.bf16.mxu0 0
    %1510 = vmatpush2.bf16.msra.mxu0 0
    %1511 = vmatprep.subr.bf16.mxu0 0
    %1512 = vmatpush2.bf16.msra.mxu0 0
    %1513 = vmatprep.subr.bf16.mxu0 0
    %1514 = vmatpush2.bf16.msra.mxu0 0
    %1515 = vmatprep.mubr.bf16.mxu0 0
    %1516 = vmatmul.mubr.bf16.gmra.mxu0 %v1389
    %v1517 = vpop.f32.mrf.mxu0
    %v1518 = vadd.f32 %v1475, %v1517
    %v1519 = vpop.f32.mrf.mxu0
    %v1520 = vadd.f32 %v1477, %v1519
    %v1521 = vpop.f32.mrf.mxu0
    %v1522 = vadd.f32 %v1479, %v1521
    %v1523 = vpop.f32.mrf.mxu0
    %v1524 = vadd.f32 %v1481, %v1523
    %1525 = vdwg.mxu0
    %v1528 = vrot.slane %v1518, 1
    %v1529 = vrot.slane %v1520, 1
    %v1532 = vmax.f32 %v1518, %v1528
    %v1533 = vmax.f32 %v1520, %v1529
    %v1536 = vrot.slane %v1532, 1
    %v1537 = vrot.slane %v1533, 1
    %v1540 = vrot.slane %v1532, 2
    %v1541 = vrot.slane %v1533, 2
    %v1544 = vrot.slane %v1532, 3
    %v1545 = vrot.slane %v1533, 3
    %v1548 = vsel %vm484, %v1532, %v1536
    %v1549 = vsel %vm484, %v1533, %v1537
    %v1550 = vsel %vm487, %v1548, %v1540
    %v1551 = vsel %vm487, %v1549, %v1541
    %v1552 = vsel %vm490, %v1550, %v1544
    %v1553 = vsel %vm490, %v1551, %v1545
    %1555 = vrot.lane.b32.xlu0 %v1552, 108
    %v1556 = vpop.permute.xlu0 %1555
    %v1558 = vmax.f32 %v1552, %v1556
    %1560 = vrot.lane.b32.xlu0 %v1553, 108
    %v1561 = vpop.permute.xlu0 %1560
    %v1563 = vmax.f32 %v1552, %v1561
    %v1564 = vmax.f32 %v1553, %v1561
    %1566 = vrot.lane.b32.xlu0 %v1558, 108
    %v1567 = vpop.permute.xlu0 %1566
    %1569 = vrot.lane.b32.xlu0 %v1558, 88
    %v1570 = vpop.permute.xlu0 %1569
    %1574 = vrot.lane.b32.xlu0 %v1563, 68
    %v1575 = vpop.permute.xlu0 %1574
    %1576 = vrot.lane.b32.xlu0 %v1564, 68
    %v1577 = vpop.permute.xlu0 %1576
    %v1578 = vsel %vm573, %v1575, %v1577
    %v1580 = vsel %vm611, %v1558, %v1567
    %v1581 = vsel %vm617, %v1580, %v1570
    %v1582 = vsel %vm623, %v1581, %v1578
    %v1583 = vmax.f32 %v1582, 0.0
    %v1585 = vrot.slane %v1583, 1
    %1586 = vrot.lane.b32.xlu0 %v1585, 80
    %v1587 = vpop.permute.xlu0 %1586
    %v1589 = vrot.slane %v1583, 2
    %1590 = vrot.lane.b32.xlu0 %v1589, 32
    %v1591 = vpop.permute.xlu0 %1590
    %v1593 = vrot.slane %v1583, 3
    %1594 = vrot.lane.b32.xlu0 %v1593, 112
    %v1595 = vpop.permute.xlu0 %1594
    %v1597 = vsel %vm629, %v1583, %v1587
    %vm1598 = vcmask 261120
    %v1599 = vsel %vm1598, %v1587, %v1591
    %v1600 = vsel %vm122, %v1599, %v1595
    %v1603 = vrot.slane %v1522, 1
    %v1604 = vrot.slane %v1524, 1
    %v1607 = vmax.f32 %v1522, %v1603
    %v1608 = vmax.f32 %v1524, %v1604
    %v1611 = vrot.slane %v1607, 1
    %v1612 = vrot.slane %v1608, 1
    %v1615 = vrot.slane %v1607, 2
    %v1616 = vrot.slane %v1608, 2
    %v1619 = vrot.slane %v1607, 3
    %v1620 = vrot.slane %v1608, 3
    %v1623 = vsel %vm484, %v1607, %v1611
    %v1624 = vsel %vm484, %v1608, %v1612
    %v1625 = vsel %vm487, %v1623, %v1615
    %v1626 = vsel %vm487, %v1624, %v1616
    %v1627 = vsel %vm490, %v1625, %v1619
    %v1628 = vsel %vm490, %v1626, %v1620
    %1630 = vrot.lane.b32.xlu0 %v1627, 108
    %v1631 = vpop.permute.xlu0 %1630
    %v1633 = vmax.f32 %v1627, %v1631
    %1635 = vrot.lane.b32.xlu0 %v1628, 108
    %v1636 = vpop.permute.xlu0 %1635
    %v1638 = vmax.f32 %v1627, %v1636
    %v1639 = vmax.f32 %v1628, %v1636
    %1641 = vrot.lane.b32.xlu0 %v1633, 108
    %v1642 = vpop.permute.xlu0 %1641
    %1644 = vrot.lane.b32.xlu0 %v1633, 88
    %v1645 = vpop.permute.xlu0 %1644
    %1649 = vrot.lane.b32.xlu0 %v1638, 68
    %v1650 = vpop.permute.xlu0 %1649
    %1651 = vrot.lane.b32.xlu0 %v1639, 68
    %v1652 = vpop.permute.xlu0 %1651
    %v1653 = vsel %vm573, %v1650, %v1652
    %v1655 = vsel %vm611, %v1633, %v1642
    %v1656 = vsel %vm617, %v1655, %v1645
    %v1657 = vsel %vm623, %v1656, %v1653
    %v1658 = vmax.f32 %v1657, 0.0
    %v1660 = vrot.slane %v1658, 1
    %1661 = vrot.lane.b32.xlu0 %v1660, 80
    %v1662 = vpop.permute.xlu0 %1661
    %v1664 = vrot.slane %v1658, 2
    %1665 = vrot.lane.b32.xlu0 %v1664, 32
    %v1666 = vpop.permute.xlu0 %1665
    %v1668 = vrot.slane %v1658, 3
    %1669 = vrot.lane.b32.xlu0 %v1668, 112
    %v1670 = vpop.permute.xlu0 %1669
    %v1672 = vsel %vm629, %v1658, %v1662
    %v1673 = vsel %vm1598, %v1662, %v1666
    %v1674 = vsel %vm122, %v1673, %v1670
    %v1677 = vrot.slane %v1672, 7
    %v1678 = vrot.slane %v1674, 7
    %v1679 = vrot.slane %v1670, 7
    %v1683 = vsel %vm484, %v1597, %v1677
    %v1684 = vsel %vm484, %v1600, %v1678
    %v1685 = vsel %vm484, %v1595, %v1679
    %v1686 = vpack.c.bf16 %v1683, %v1683
    %v1687 = vpack.c.bf16 %v1684, %v1684
    %v1688 = vpack.c.bf16 %v1685, %v1685
    %v1689 = vld [vmem:[%s5] sm:$0xf]
    %v1690 = vld [vmem:[%s5 + $0x4] sm:$0xf]
    %v1691 = vld [vmem:[%s5 + $0x8] sm:$0xf]
    %v1692 = vld [vmem:[%s5 + $0xc] sm:$0xf]
    %v1693 = vld [vmem:[%s5 + $0x10] sm:$0xf]
    %v1694 = vld [vmem:[%s5 + $0x14] sm:$0xf]
    %v1695 = vld [vmem:[%s5 + $0x18] sm:$0xf]
    %v1696 = vld [vmem:[%s5 + $0x1c] sm:$0xf]
    %v1697 = vld [vmem:[%s5 + $0x20] sm:$0xf]
    %v1698 = vld [vmem:[%s5 + $0x24] sm:$0xf]
    %v1699 = vld [vmem:[%s5 + $0x28] sm:$0xf]
    %v1700 = vld [vmem:[%s5 + $0x2c] sm:$0xf]
    %v1701 = vld [vmem:[%s5 + $0x30] sm:$0xf]
    %v1702 = vld [vmem:[%s5 + $0x34] sm:$0xf]
    %v1703 = vld [vmem:[%s5 + $0x38] sm:$0xf]
    %v1704 = vld [vmem:[%s5 + $0x3c] sm:$0xf]
    %v1705 = vld [vmem:[%s5 + $0x40] sm:$0xf]
    %v1706 = vld [vmem:[%s5 + $0x44] sm:$0xf]
    %v1707 = vld [vmem:[%s5 + $0x48] sm:$0xf]
    %v1708 = vld [vmem:[%s5 + $0x4c] sm:$0xf]
    %v1709 = vld [vmem:[%s5 + $0x50] sm:$0xf]
    %v1710 = vld [vmem:[%s5 + $0x54] sm:$0xf]
    %v1711 = vld [vmem:[%s5 + $0x58] sm:$0xf]
    %v1712 = vld [vmem:[%s5 + $0x5c] sm:$0xf]
    %v1713 = vld [vmem:[%s5 + $0x60] sm:$0xf]
    %v1714 = vld [vmem:[%s5 + $0x64] sm:$0xf]
    %v1715 = vld [vmem:[%s5 + $0x68] sm:$0xf]
    %v1716 = vld [vmem:[%s5 + $0x6c] sm:$0xf]
    %v1717 = vld [vmem:[%s5 + $0x70] sm:$0xf]
    %v1718 = vld [vmem:[%s5 + $0x74] sm:$0xf]
    %v1719 = vld [vmem:[%s5 + $0x78] sm:$0xf]
    %v1720 = vld [vmem:[%s5 + $0x7c] sm:$0xf]
    %v1721 = vld [vmem:[%s5 + $0x80] sm:$0xf]
    %v1722 = vld [vmem:[%s5 + $0x84] sm:$0xf]
    %v1723 = vld [vmem:[%s5 + $0x88] sm:$0xf]
    %v1724 = vld [vmem:[%s5 + $0x8c] sm:$0xf]
    %v1725 = vld [vmem:[%s5 + $0x90] sm:$0xf]
    %v1726 = vld [vmem:[%s5 + $0x94] sm:$0xf]
    %v1727 = vld [vmem:[%s5 + $0x98] sm:$0xf]
    %v1728 = vld [vmem:[%s5 + $0x9c] sm:$0xf]
    %v1729 = vld [vmem:[%s6] sm:$0x1]
    %v1731 = vlaneseq
    %v1732 = vshrl.u32 %v1731, 7
    %v1733 = vsub.s32 0, %v1732
    %v1734 = vrot.slane %v1729, %v1733
    %v1776 = vunpack.c.l.b16 %v1689
    %v1777 = vunpack.c.l.b16 %v1690
    %v1778 = vunpack.c.l.b16 %v1691
    %v1779 = vunpack.c.l.b16 %v1692
    %v1780 = vunpack.c.l.b16 %v1693
    %v1781 = vunpack.c.l.b16 %v1694
    %v1782 = vunpack.c.l.b16 %v1695
    %v1783 = vunpack.c.l.b16 %v1696
    %v1784 = vunpack.c.l.b16 %v1697
    %v1785 = vunpack.c.l.b16 %v1698
    %v1786 = vunpack.c.l.b16 %v1699
    %v1787 = vunpack.c.l.b16 %v1700
    %v1788 = vunpack.c.l.b16 %v1701
    %v1789 = vunpack.c.l.b16 %v1702
    %v1790 = vunpack.c.l.b16 %v1703
    %v1791 = vunpack.c.l.b16 %v1704
    %v1792 = vunpack.c.l.b16 %v1705
    %v1793 = vunpack.c.l.b16 %v1706
    %v1794 = vunpack.c.l.b16 %v1707
    %v1795 = vunpack.c.l.b16 %v1708
    %v1796 = vunpack.c.l.b16 %v1709
    %v1797 = vunpack.c.l.b16 %v1710
    %v1798 = vunpack.c.l.b16 %v1711
    %v1799 = vunpack.c.l.b16 %v1712
    %v1800 = vunpack.c.l.b16 %v1713
    %v1801 = vunpack.c.l.b16 %v1714
    %v1802 = vunpack.c.l.b16 %v1715
    %v1803 = vunpack.c.l.b16 %v1716
    %v1804 = vunpack.c.l.b16 %v1717
    %v1805 = vunpack.c.l.b16 %v1718
    %v1806 = vunpack.c.l.b16 %v1719
    %v1807 = vunpack.c.l.b16 %v1720
    %v1808 = vunpack.c.l.b16 %v1721
    %v1809 = vunpack.c.l.b16 %v1722
    %v1810 = vunpack.c.l.b16 %v1723
    %v1811 = vunpack.c.l.b16 %v1724
    %v1812 = vunpack.c.l.b16 %v1725
    %v1813 = vunpack.c.l.b16 %v1726
    %v1814 = vunpack.c.l.b16 %v1727
    %v1815 = vunpack.c.l.b16 %v1728
    %v1816 = vpack.c.b16 %v1777, %v1776
    %v1817 = vpack.c.b16 %v1779, %v1778
    %v1818 = vpack.c.b16 %v1781, %v1780
    %v1819 = vpack.c.b16 %v1783, %v1782
    %v1820 = vpack.c.b16 %v1785, %v1784
    %v1821 = vpack.c.b16 %v1787, %v1786
    %v1822 = vpack.c.b16 %v1789, %v1788
    %v1823 = vpack.c.b16 %v1791, %v1790
    %v1824 = vpack.c.b16 %v1793, %v1792
    %v1825 = vpack.c.b16 %v1795, %v1794
    %v1826 = vpack.c.b16 %v1797, %v1796
    %v1827 = vpack.c.b16 %v1799, %v1798
    %v1828 = vpack.c.b16 %v1801, %v1800
    %v1829 = vpack.c.b16 %v1803, %v1802
    %v1830 = vpack.c.b16 %v1805, %v1804
    %v1831 = vpack.c.b16 %v1807, %v1806
    %v1832 = vpack.c.b16 %v1809, %v1808
    %v1833 = vpack.c.b16 %v1811, %v1810
    %v1834 = vpack.c.b16 %v1813, %v1812
    %v1835 = vpack.c.b16 %v1815, %v1814
    %vm1856 = vcmask 523264
    %v1858 = vsel %vm1856, %v1688, 0
    %1860 = vmatprep.subr.bf16.mxu0 0
    %1861 = vmatpush1.bf16.msra.mxu0 %v1823
    %1862 = vmatprep.subr.bf16.mxu0 0
    %1863 = vmatpush1.bf16.msra.mxu0 %v1822
    %1864 = vmatprep.subr.bf16.mxu0 0
    %1865 = vmatpush1.bf16.msra.mxu0 %v1821
    %1866 = vmatprep.subr.bf16.mxu0 0
    %1867 = vmatpush1.bf16.msra.mxu0 %v1820
    %1868 = vmatprep.subr.bf16.mxu0 0
    %1869 = vmatpush1.bf16.msra.mxu0 %v1819
    %1870 = vmatprep.subr.bf16.mxu0 0
    %1871 = vmatpush1.bf16.msra.mxu0 %v1818
    %1872 = vmatprep.subr.bf16.mxu0 0
    %1873 = vmatpush1.bf16.msra.mxu0 %v1817
    %1874 = vmatprep.subr.bf16.mxu0 0
    %1875 = vmatpush1.bf16.msra.mxu0 %v1816
    %1876 = vmatprep.subr.bf16.mxu0 0
    %1877 = vmatpush2.bf16.msra.mxu0 %v1831
    %1878 = vmatprep.subr.bf16.mxu0 0
    %1879 = vmatpush2.bf16.msra.mxu0 %v1830
    %1880 = vmatprep.subr.bf16.mxu0 0
    %1881 = vmatpush2.bf16.msra.mxu0 %v1829
    %1882 = vmatprep.subr.bf16.mxu0 0
    %1883 = vmatpush2.bf16.msra.mxu0 %v1828
    %1884 = vmatprep.subr.bf16.mxu0 0
    %1885 = vmatpush2.bf16.msra.mxu0 %v1827
    %1886 = vmatprep.subr.bf16.mxu0 0
    %1887 = vmatpush2.bf16.msra.mxu0 %v1826
    %1888 = vmatprep.subr.bf16.mxu0 0
    %1889 = vmatpush2.bf16.msra.mxu0 %v1825
    %1890 = vmatprep.subr.bf16.mxu0 0
    %1891 = vmatpush2.bf16.msra.mxu0 %v1824
    %1892 = vmatprep.mubr.bf16.mxu0 %v1687
    %1893 = vmatmul.mubr.bf16.gmra.mxu0 %v1686
    %v1894 = vpop.f32.mrf.mxu0
    %v1895 = vadd.f32 %v1734, %v1894
    %v1896 = vpop.f32.mrf.mxu0
    %v1897 = vpop.f32.mrf.mxu0
    %v1898 = vpop.f32.mrf.mxu0
    %1899 = vdwg.mxu0
    %1900 = vmatprep.subr.bf16.mxu0 0
    %1901 = vmatpush1.bf16.msra.mxu0 0
    %1902 = vmatprep.subr.bf16.mxu0 0
    %1903 = vmatpush1.bf16.msra.mxu0 0
    %1904 = vmatprep.subr.bf16.mxu0 0
    %1905 = vmatpush1.bf16.msra.mxu0 0
    %1906 = vmatprep.subr.bf16.mxu0 0
    %1907 = vmatpush1.bf16.msra.mxu0 0
    %1908 = vmatprep.subr.bf16.mxu0 0
    %1909 = vmatpush1.bf16.msra.mxu0 %v1835
    %1910 = vmatprep.subr.bf16.mxu0 0
    %1911 = vmatpush1.bf16.msra.mxu0 %v1834
    %1912 = vmatprep.subr.bf16.mxu0 0
    %1913 = vmatpush1.bf16.msra.mxu0 %v1833
    %1914 = vmatprep.subr.bf16.mxu0 0
    %1915 = vmatpush1.bf16.msra.mxu0 %v1832
    %1916 = vmatprep.subr.bf16.mxu0 0
    %1917 = vmatpush2.bf16.msra.mxu0 0
    %1918 = vmatprep.subr.bf16.mxu0 0
    %1919 = vmatpush2.bf16.msra.mxu0 0
    %1920 = vmatprep.subr.bf16.mxu0 0
    %1921 = vmatpush2.bf16.msra.mxu0 0
    %1922 = vmatprep.subr.bf16.mxu0 0
    %1923 = vmatpush2.bf16.msra.mxu0 0
    %1924 = vmatprep.subr.bf16.mxu0 0
    %1925 = vmatpush2.bf16.msra.mxu0 0
    %1926 = vmatprep.subr.bf16.mxu0 0
    %1927 = vmatpush2.bf16.msra.mxu0 0
    %1928 = vmatprep.subr.bf16.mxu0 0
    %1929 = vmatpush2.bf16.msra.mxu0 0
    %1930 = vmatprep.subr.bf16.mxu0 0
    %1931 = vmatpush2.bf16.msra.mxu0 0
    %1932 = vmatprep.mubr.bf16.mxu0 0
    %1933 = vmatmul.mubr.bf16.gmra.mxu0 %v1858
    %v1934 = vpop.f32.mrf.mxu0
    %v1935 = vadd.f32 %v1895, %v1934
    %v1936 = vpop.f32.mrf.mxu0
    %v1937 = vpop.f32.mrf.mxu0
    %v1938 = vpop.f32.mrf.mxu0
    %1939 = vdwg.mxu0
    %v1940 = vmax.f32 %v1935, 0.0
    %v1941 = vpack.c.bf16 %v1940, %v1940
    %v1942 = vld [vmem:[%s7] sm:$0xf]
    %v1943 = vld [vmem:[%s7 + $0x4] sm:$0xf]
    %v1944 = vld [vmem:[%s7 + $0x8] sm:$0xf]
    %v1945 = vld [vmem:[%s7 + $0xc] sm:$0xf]
    %v1946 = vld [vmem:[%s7 + $0x10] sm:$0xf]
    %v1947 = vld [vmem:[%s7 + $0x14] sm:$0xf]
    %v1948 = vld [vmem:[%s7 + $0x18] sm:$0x1]
    %v1949 = vld [vmem:[%s8] sm:$0x1]
    %v1951 = vlaneseq
    %v1952 = vshrl.u32 %v1951, 7
    %v1953 = vsub.s32 0, %v1952
    %v1954 = vrot.slane %v1949, %v1953
    %v1963 = vunpack.c.l.b16 %v1942
    %v1964 = vunpack.c.l.b16 %v1943
    %v1965 = vunpack.c.l.b16 %v1944
    %v1966 = vunpack.c.l.b16 %v1945
    %v1967 = vunpack.c.l.b16 %v1946
    %v1968 = vunpack.c.l.b16 %v1947
    %v1969 = vunpack.c.l.b16 %v1948
    %v1970 = vpack.c.b16 %v1964, %v1963
    %v1971 = vpack.c.b16 %v1966, %v1965
    %v1972 = vpack.c.b16 %v1968, %v1967
    %v1973 = vpack.c.b16 %v1969, %v1969
    %v1978 = vsel %vm620, %v1941, 0
    %v1981 = vsel %vm484, %v1973, 0
    %1983 = vmatprep.subr.bf16.mxu0 0
    %1984 = vmatpush1.bf16.msra.mxu0 0
    %1985 = vmatprep.subr.bf16.mxu0 0
    %1986 = vmatpush1.bf16.msra.mxu0 0
    %1987 = vmatprep.subr.bf16.mxu0 0
    %1988 = vmatpush1.bf16.msra.mxu0 0
    %1989 = vmatprep.subr.bf16.mxu0 0
    %1990 = vmatpush1.bf16.msra.mxu0 0
    %1991 = vmatprep.subr.bf16.mxu0 0
    %1992 = vmatpush1.bf16.msra.mxu0 %v1981
    %1993 = vmatprep.subr.bf16.mxu0 0
    %1994 = vmatpush1.bf16.msra.mxu0 %v1972
    %1995 = vmatprep.subr.bf16.mxu0 0
    %1996 = vmatpush1.bf16.msra.mxu0 %v1971
    %1997 = vmatprep.subr.bf16.mxu0 0
    %1998 = vmatpush1.bf16.msra.mxu0 %v1970
    %1999 = vmatprep.subr.bf16.mxu0 0
    %2000 = vmatpush2.bf16.msra.mxu0 0
    %2001 = vmatprep.subr.bf16.mxu0 0
    %2002 = vmatpush2.bf16.msra.mxu0 0
    %2003 = vmatprep.subr.bf16.mxu0 0
    %2004 = vmatpush2.bf16.msra.mxu0 0
    %2005 = vmatprep.subr.bf16.mxu0 0
    %2006 = vmatpush2.bf16.msra.mxu0 0
    %2007 = vmatprep.subr.bf16.mxu0 0
    %2008 = vmatpush2.bf16.msra.mxu0 0
    %2009 = vmatprep.subr.bf16.mxu0 0
    %2010 = vmatpush2.bf16.msra.mxu0 0
    %2011 = vmatprep.subr.bf16.mxu0 0
    %2012 = vmatpush2.bf16.msra.mxu0 0
    %2013 = vmatprep.subr.bf16.mxu0 0
    %2014 = vmatpush2.bf16.msra.mxu0 0
    %2015 = vmatprep.mubr.bf16.mxu0 0
    %2016 = vmatmul.mubr.bf16.gmra.mxu0 %v1978
    %v2017 = vpop.f32.mrf.mxu0
    %v2018 = vadd.f32 %v1954, %v2017
    %v2019 = vpop.f32.mrf.mxu0
    %v2020 = vpop.f32.mrf.mxu0
    %v2021 = vpop.f32.mrf.mxu0
    %2022 = vdwg.mxu0
    %vm2023 = vcmask 74752
    %v2024 = vsel %vm2023, %v2018, -inf
    %2025 = vmax.xlane.f32.xlu0 %v2024
    %v2026 = vpop.xlane.xlu0 %2025
    %v2027 = vsub.f32 %v2018, %v2026
    %v2028 = vmul.f32 %v2027, 1.442695
    %v2029 = vpow.pop %v2028
    %v2030 = vsel %vm2023, %v2029, 0.0
    %2031 = vadd.xlane.f32.xlu0 %v2030
    %v2032 = vpop.xlane.xlu0 %2031
    %v2033 = vlog2.pop %v2032
    %v2034 = vmul.f32 %v2033, 0.6931472
    %v2035 = vsub.f32 %v2027, %v2034
    %2036 = vst.msk [vmem:[#allocation2] sm:$0x3] %vm2023, %v2035
    // Predicated region
    $region38: #{tpu_custom_call.1} parent=1 // pred_check
      _
    $region39: #{tpu_custom_call.1} parent=1 // pred_check_branch
      %2038 = sbr.rel (0) target = $region41
    $region40: #{tpu_custom_call.1} parent=1 // pred_region
      %s2040 = ssub.s32 32, 32
      %2041 = vsyncadd [#allocation3], %s2040
      %s2043 = sshll.u32 [#allocation2], 4
      %s2044 = int_to_ptr.vmem [resolvable:$true] %s2043
      %2046 = dma.vmem_to_hbm [thread:$0]  %s2044, 32, %s9, [#allocation3]
    $region41: #{tpu_custom_call.1} parent=1 // pred_fallthru
      _
    // Predicated region
    $region42: #{tpu_custom_call.1} parent=1 // pred_check
      _
    $region43: #{tpu_custom_call.1} parent=1 // pred_check_branch
      %2048 = sbr.rel (0) target = $region45
    $region44: #{tpu_custom_call.1} parent=1 // pred_region
      %2049 = dma.done [#allocation3], 32
    $region45: #{tpu_custom_call.1} parent=1 // pred_fallthru
      _
    %2050 = vsyncpa [#allocation3], 1

</llo_original>
